<compile_context>
chip_gen: v6e
topology: v6e:2x2x1
jax: 0.10.0
libtpu: 0.0.40
codegen_flags: <defaults>
</compile_context>

<pallas_src>
import functools

import jax
import jax.numpy as jnp
from jax.experimental import pallas as pl
from jax.experimental.pallas import tpu as pltpu


# -----------------------------------------------------------------------------
# Pallas kernel: whole 2-layer LSTM recurrence in one invocation.
# -----------------------------------------------------------------------------
def _lstm_kernel(x_ref,      # (T*Bp, D)   time-major, batch-padded, flattened
                 wih0_ref,   # (D, 4H)
                 whh0_ref,   # (H, 4H)
                 b0_ref,     # (1, 4H)     b_ih0 + b_hh0
                 w1_ref,     # (2H, 4H)    [W_ih1 ; W_hh1] stacked
                 b1_ref,     # (1, 4H)     b_ih1 + b_hh1
                 out_ref,    # (Bp, H)     last-step hidden state of layer 1
                 *, T, Bp, H):
    # ---- prologue: layer-0 input projections for all T steps at once -------
    # (T*Bp, D) @ (D, 4H)  — one MXU pass instead of T tiny ones.
    proj0 = (jnp.dot(x_ref[...], wih0_ref[...],
                     preferred_element_type=jnp.float32)
             + b0_ref[...])                       # (T*Bp, 4H)

    whh0 = whh0_ref[...]
    w1 = w1_ref[...]
    b1 = b1_ref[...]

    h0 = jnp.zeros((Bp, H), jnp.float32)
    c0 = jnp.zeros((Bp, H), jnp.float32)
    h1 = jnp.zeros((Bp, H), jnp.float32)
    c1 = jnp.zeros((Bp, H), jnp.float32)

    def apply_gates(gates, c_prev):
        # PyTorch gate order: input, forget, cell(g), output.
        # One sigmoid + one tanh over the full (Bp, 4H) vreg, then slice.
        sig = jax.nn.sigmoid(gates)
        tg = jnp.tanh(gates)
        i = sig[:, 0 * H:1 * H]
        f = sig[:, 1 * H:2 * H]
        g = tg[:, 2 * H:3 * H]
        o = sig[:, 3 * H:4 * H]
        c_new = f * c_prev + i * g
        h_new = o * jnp.tanh(c_new)
        return h_new, c_new

    # Fully unrolled at trace time (T is small & static): equivalent to
    # lax.fori_loop(0, T, ..., unroll=True) but with static, aligned slices.
    for t in range(T):
        # layer 0: input projection precomputed, only the recurrent matmul left
        g0 = (proj0[t * Bp:(t + 1) * Bp, :]
              + jnp.dot(h0, whh0, preferred_element_type=jnp.float32))
        h0, c0 = apply_gates(g0, c0)

        # layer 1: single fused matmul  [h0, h1] @ [Wih1; Whh1]
        inp1 = jnp.concatenate([h0, h1], axis=1)          # (Bp, 2H)
        g1 = jnp.dot(inp1, w1, preferred_element_type=jnp.float32) + b1
        h1, c1 = apply_gates(g1, c1)

    out_ref[...] = h1


# -----------------------------------------------------------------------------
# Wrapper
# -----------------------------------------------------------------------------
def lstm_forward(x, params, *, d_feat, hidden):
    """x: (B, d_feat * T) float32 -> (B,) float32."""
    B = x.shape[0]
    x = x.reshape(B, d_feat, -1)            # (B, D, T)   -- PyTorch reshape
    x = jnp.transpose(x, (0, 2, 1))         # (B, T, D)   -- PyTorch permute
    T = x.shape[1]

    # Pad batch to a full sublane tile (multiple of 8).
    Bp = ((B + 7) // 8) * 8
    x_tm = jnp.transpose(x, (1, 0, 2))      # (T, B, D)   -- time-major
    if Bp != B:
        x_tm = jnp.pad(x_tm, ((0, 0), (0, Bp - B), (0, 0)))
    x_flat = x_tm.reshape(T * Bp, d_feat)   # (T*Bp, D)

    (wih0T, whh0T, b0, w1, b1, wfcT, bfc) = params

    vmem = pl.BlockSpec(memory_space=pltpu.MemorySpace.VMEM)
    h_last = pl.pallas_call(
        functools.partial(_lstm_kernel, T=T, Bp=Bp, H=hidden),
        out_shape=jax.ShapeDtypeStruct((Bp, hidden), jnp.float32),
        in_specs=[vmem] * 6,
        out_specs=vmem,
    )(x_flat, wih0T, whh0T, b0, w1, b1)

    # FC head (degenerate (H,1) matmul) done by XLA outside the kernel.
    y = h_last[:B] @ wfcT + bfc             # (B, 1)
    return y[:, 0]                          # .squeeze()


# -----------------------------------------------------------------------------
# Deterministic parameter init (PyTorch-style uniform(-1/sqrt(H), 1/sqrt(H)))
# -----------------------------------------------------------------------------
def init_params(key, d_feat, hidden):
    k = 1.0 / jnp.sqrt(hidden)
    keys = jax.random.split(key, 10)

    def u(kk, shape):
        return jax.random.uniform(kk, shape, jnp.float32, -k, k)

    # layer 0
    w_ih0 = u(keys[0], (4 * hidden, d_feat))
    w_hh0 = u(keys[1], (4 * hidden, hidden))
    b_ih0 = u(keys[2], (4 * hidden,))
    b_hh0 = u(keys[3], (4 * hidden,))
    # layer 1
    w_ih1 = u(keys[4], (4 * hidden, hidden))
    w_hh1 = u(keys[5], (4 * hidden, hidden))
    b_ih1 = u(keys[6], (4 * hidden,))
    b_hh1 = u(keys[7], (4 * hidden,))
    # fc head
    w_fc = u(keys[8], (1, hidden))
    b_fc = u(keys[9], (1,))

    params = (
        w_ih0.T,                                               # (D, 4H)
        w_hh0.T,                                               # (H, 4H)
        (b_ih0 + b_hh0).reshape(1, 4 * hidden),                # (1, 4H)
        jnp.concatenate([w_ih1.T, w_hh1.T], axis=0),           # (2H, 4H)
        (b_ih1 + b_hh1).reshape(1, 4 * hidden),                # (1, 4H)
        w_fc.T,                                                # (H, 1)
        b_fc.reshape(1, 1),                                    # (1, 1)
    )
    return params


# -----------------------------------------------------------------------------
# Pure-JAX reference (same math, plain ops) for a correctness check.
# -----------------------------------------------------------------------------
def lstm_ref(x, params, *, d_feat, hidden):
    (wih0T, whh0T, b0, w1, b1, wfcT, bfc) = params
    B = x.shape[0]
    x = x.reshape(B, d_feat, -1).transpose(0, 2, 1)   # (B, T, D)
    T = x.shape[1]
    H = hidden
    h0 = c0 = h1 = c1 = jnp.zeros((B, H), jnp.float32)

    def gates_to_hc(g, c):
        i = jax.nn.sigmoid(g[:, 0 * H:1 * H])
        f = jax.nn.sigmoid(g[:, 1 * H:2 * H])
        gg = jnp.tanh(g[:, 2 * H:3 * H])
        o = jax.nn.sigmoid(g[:, 3 * H:4 * H])
        c = f * c + i * gg
        h = o * jnp.tanh(c)
        return h, c

    for t in range(T):
        g0 = x[:, t, :] @ wih0T + h0 @ whh0T + b0
        h0, c0 = gates_to_hc(g0, c0)
        g1 = jnp.concatenate([h0, h1], axis=1) @ w1 + b1
        h1, c1 = gates_to_hc(g1, c1)
    return (h1 @ wfcT + bfc)[:, 0]


if __name__ == "__main__":
    D_FEAT = 6
    HIDDEN = 32
    T = 8
    B = 2

    key = jax.random.PRNGKey(0)
    k_param, k_x = jax.random.split(key)
    params = init_params(k_param, D_FEAT, HIDDEN)
    # Input matches the PyTorch call convention: (B, d_feat * T)
    x = jax.random.normal(k_x, (B, D_FEAT * T), jnp.float32)

    fwd = jax.jit(functools.partial(lstm_forward, d_feat=D_FEAT, hidden=HIDDEN))
    y = jax.block_until_ready(fwd(x, params))

    y_ref = lstm_ref(x, params, d_feat=D_FEAT, hidden=HIDDEN)
    assert y.shape == (B,), y.shape
    assert jnp.allclose(y, y_ref, rtol=1e-4, atol=1e-5), (y, y_ref)

    print("KERNEL_OK")
</pallas_src>

<mosaic_0001>
module attributes {stable_mosaic.version = 11 : i64} {
  func.func @_lstm_kernel(%arg0: memref<64x6xf32, #tpu.memory_space<vmem>>, %arg1: memref<6x128xf32, #tpu.memory_space<vmem>>, %arg2: memref<32x128xf32, #tpu.memory_space<vmem>>, %arg3: memref<1x128xf32, #tpu.memory_space<vmem>>, %arg4: memref<64x128xf32, #tpu.memory_space<vmem>>, %arg5: memref<1x128xf32, #tpu.memory_space<vmem>>, %arg6: memref<8x32xf32, #tpu.memory_space<vmem>>) attributes {dimension_semantics = [], scalar_prefetch = 0 : i64, scratch_operands = 0 : i64, tpu.core_type = #tpu.core_type<tc>} {
    %c0 = arith.constant 0 : index
    %c0_0 = arith.constant 0 : index
    %0 = vector.load %arg0[%c0, %c0_0] : memref<64x6xf32, #tpu.memory_space<vmem>>, vector<64x6xf32>
    %c0_1 = arith.constant 0 : index
    %c0_2 = arith.constant 0 : index
    %1 = vector.load %arg1[%c0_1, %c0_2] : memref<6x128xf32, #tpu.memory_space<vmem>>, vector<6x128xf32>
    %cst = arith.constant dense<0.000000e+00> : vector<64x128xf32>
    %2 = tpu.matmul %0, %1, %cst {dimension_numbers = #tpu.dot_dimension_numbers<[1], [0], [0], [1], [0, 0, 1, 1], [], []>} : vector<64x6xf32>, vector<6x128xf32>, vector<64x128xf32> -> vector<64x128xf32>
    %c0_3 = arith.constant 0 : index
    %c0_4 = arith.constant 0 : index
    %3 = vector.load %arg3[%c0_3, %c0_4] : memref<1x128xf32, #tpu.memory_space<vmem>>, vector<1x128xf32>
    %4 = vector.broadcast %3 : vector<1x128xf32> to vector<64x128xf32>
    %5 = arith.addf %2, %4 : vector<64x128xf32>
    %c0_5 = arith.constant 0 : index
    %c0_6 = arith.constant 0 : index
    %6 = vector.load %arg2[%c0_5, %c0_6] : memref<32x128xf32, #tpu.memory_space<vmem>>, vector<32x128xf32>
    %c0_7 = arith.constant 0 : index
    %c0_8 = arith.constant 0 : index
    %7 = vector.load %arg4[%c0_7, %c0_8] : memref<64x128xf32, #tpu.memory_space<vmem>>, vector<64x128xf32>
    %c0_9 = arith.constant 0 : index
    %c0_10 = arith.constant 0 : index
    %8 = vector.load %arg5[%c0_9, %c0_10] : memref<1x128xf32, #tpu.memory_space<vmem>>, vector<1x128xf32>
    %cst_11 = arith.constant 0.000000e+00 : f32
    %9 = vector.broadcast %cst_11 : f32 to vector<8x32xf32>
    %cst_12 = arith.constant 0.000000e+00 : f32
    %10 = vector.broadcast %cst_12 : f32 to vector<8x32xf32>
    %cst_13 = arith.constant 0.000000e+00 : f32
    %11 = vector.broadcast %cst_13 : f32 to vector<8x32xf32>
    %cst_14 = arith.constant 0.000000e+00 : f32
    %12 = vector.broadcast %cst_14 : f32 to vector<8x32xf32>
    %13 = vector.extract_strided_slice %5 {offsets = [0, 0], sizes = [8, 128], strides = [1, 1]} : vector<64x128xf32> to vector<8x128xf32>
    %cst_15 = arith.constant dense<0.000000e+00> : vector<8x128xf32>
    %14 = tpu.matmul %9, %6, %cst_15 {dimension_numbers = #tpu.dot_dimension_numbers<[1], [0], [0], [1], [0, 0, 1, 1], [], []>} : vector<8x32xf32>, vector<32x128xf32>, vector<8x128xf32> -> vector<8x128xf32>
    %15 = arith.addf %13, %14 : vector<8x128xf32>
    %16 = arith.negf %15 : vector<8x128xf32>
    %17 = math.exp %16 : vector<8x128xf32>
    %cst_16 = arith.constant 1.000000e+00 : f32
    %18 = vector.broadcast %cst_16 : f32 to vector<8x128xf32>
    %19 = arith.addf %18, %17 : vector<8x128xf32>
    %20 = arith.divf %18, %19 : vector<8x128xf32>
    %21 = math.tanh %15 : vector<8x128xf32>
    %22 = vector.extract_strided_slice %20 {offsets = [0, 0], sizes = [8, 32], strides = [1, 1]} : vector<8x128xf32> to vector<8x32xf32>
    %23 = vector.extract_strided_slice %20 {offsets = [0, 32], sizes = [8, 32], strides = [1, 1]} : vector<8x128xf32> to vector<8x32xf32>
    %24 = vector.extract_strided_slice %21 {offsets = [0, 64], sizes = [8, 32], strides = [1, 1]} : vector<8x128xf32> to vector<8x32xf32>
    %25 = vector.extract_strided_slice %20 {offsets = [0, 96], sizes = [8, 32], strides = [1, 1]} : vector<8x128xf32> to vector<8x32xf32>
    %26 = arith.mulf %23, %10 : vector<8x32xf32>
    %27 = arith.mulf %22, %24 : vector<8x32xf32>
    %28 = arith.addf %26, %27 : vector<8x32xf32>
    %29 = math.tanh %28 : vector<8x32xf32>
    %30 = arith.mulf %25, %29 : vector<8x32xf32>
    %31 = tpu.concatenate %30, %11 in 1 : vector<8x32xf32>, vector<8x32xf32> -> vector<8x64xf32>
    %cst_17 = arith.constant dense<0.000000e+00> : vector<8x128xf32>
    %32 = tpu.matmul %31, %7, %cst_17 {dimension_numbers = #tpu.dot_dimension_numbers<[1], [0], [0], [1], [0, 0, 1, 1], [], []>} : vector<8x64xf32>, vector<64x128xf32>, vector<8x128xf32> -> vector<8x128xf32>
    %33 = vector.broadcast %8 : vector<1x128xf32> to vector<8x128xf32>
    %34 = arith.addf %32, %33 : vector<8x128xf32>
    %35 = arith.negf %34 : vector<8x128xf32>
    %36 = math.exp %35 : vector<8x128xf32>
    %cst_18 = arith.constant 1.000000e+00 : f32
    %37 = vector.broadcast %cst_18 : f32 to vector<8x128xf32>
    %38 = arith.addf %37, %36 : vector<8x128xf32>
    %39 = arith.divf %37, %38 : vector<8x128xf32>
    %40 = math.tanh %34 : vector<8x128xf32>
    %41 = vector.extract_strided_slice %39 {offsets = [0, 0], sizes = [8, 32], strides = [1, 1]} : vector<8x128xf32> to vector<8x32xf32>
    %42 = vector.extract_strided_slice %39 {offsets = [0, 32], sizes = [8, 32], strides = [1, 1]} : vector<8x128xf32> to vector<8x32xf32>
    %43 = vector.extract_strided_slice %40 {offsets = [0, 64], sizes = [8, 32], strides = [1, 1]} : vector<8x128xf32> to vector<8x32xf32>
    %44 = vector.extract_strided_slice %39 {offsets = [0, 96], sizes = [8, 32], strides = [1, 1]} : vector<8x128xf32> to vector<8x32xf32>
    %45 = arith.mulf %42, %12 : vector<8x32xf32>
    %46 = arith.mulf %41, %43 : vector<8x32xf32>
    %47 = arith.addf %45, %46 : vector<8x32xf32>
    %48 = math.tanh %47 : vector<8x32xf32>
    %49 = arith.mulf %44, %48 : vector<8x32xf32>
    %50 = vector.extract_strided_slice %5 {offsets = [8, 0], sizes = [8, 128], strides = [1, 1]} : vector<64x128xf32> to vector<8x128xf32>
    %cst_19 = arith.constant dense<0.000000e+00> : vector<8x128xf32>
    %51 = tpu.matmul %30, %6, %cst_19 {dimension_numbers = #tpu.dot_dimension_numbers<[1], [0], [0], [1], [0, 0, 1, 1], [], []>} : vector<8x32xf32>, vector<32x128xf32>, vector<8x128xf32> -> vector<8x128xf32>
    %52 = arith.addf %50, %51 : vector<8x128xf32>
    %53 = arith.negf %52 : vector<8x128xf32>
    %54 = math.exp %53 : vector<8x128xf32>
    %cst_20 = arith.constant 1.000000e+00 : f32
    %55 = vector.broadcast %cst_20 : f32 to vector<8x128xf32>
    %56 = arith.addf %55, %54 : vector<8x128xf32>
    %57 = arith.divf %55, %56 : vector<8x128xf32>
    %58 = math.tanh %52 : vector<8x128xf32>
    %59 = vector.extract_strided_slice %57 {offsets = [0, 0], sizes = [8, 32], strides = [1, 1]} : vector<8x128xf32> to vector<8x32xf32>
    %60 = vector.extract_strided_slice %57 {offsets = [0, 32], sizes = [8, 32], strides = [1, 1]} : vector<8x128xf32> to vector<8x32xf32>
    %61 = vector.extract_strided_slice %58 {offsets = [0, 64], sizes = [8, 32], strides = [1, 1]} : vector<8x128xf32> to vector<8x32xf32>
    %62 = vector.extract_strided_slice %57 {offsets = [0, 96], sizes = [8, 32], strides = [1, 1]} : vector<8x128xf32> to vector<8x32xf32>
    %63 = arith.mulf %60, %28 : vector<8x32xf32>
    %64 = arith.mulf %59, %61 : vector<8x32xf32>
    %65 = arith.addf %63, %64 : vector<8x32xf32>
    %66 = math.tanh %65 : vector<8x32xf32>
    %67 = arith.mulf %62, %66 : vector<8x32xf32>
    %68 = tpu.concatenate %67, %49 in 1 : vector<8x32xf32>, vector<8x32xf32> -> vector<8x64xf32>
    %cst_21 = arith.constant dense<0.000000e+00> : vector<8x128xf32>
    %69 = tpu.matmul %68, %7, %cst_21 {dimension_numbers = #tpu.dot_dimension_numbers<[1], [0], [0], [1], [0, 0, 1, 1], [], []>} : vector<8x64xf32>, vector<64x128xf32>, vector<8x128xf32> -> vector<8x128xf32>
    %70 = vector.broadcast %8 : vector<1x128xf32> to vector<8x128xf32>
    %71 = arith.addf %69, %70 : vector<8x128xf32>
    %72 = arith.negf %71 : vector<8x128xf32>
    %73 = math.exp %72 : vector<8x128xf32>
    %cst_22 = arith.constant 1.000000e+00 : f32
    %74 = vector.broadcast %cst_22 : f32 to vector<8x128xf32>
    %75 = arith.addf %74, %73 : vector<8x128xf32>
    %76 = arith.divf %74, %75 : vector<8x128xf32>
    %77 = math.tanh %71 : vector<8x128xf32>
    %78 = vector.extract_strided_slice %76 {offsets = [0, 0], sizes = [8, 32], strides = [1, 1]} : vector<8x128xf32> to vector<8x32xf32>
    %79 = vector.extract_strided_slice %76 {offsets = [0, 32], sizes = [8, 32], strides = [1, 1]} : vector<8x128xf32> to vector<8x32xf32>
    %80 = vector.extract_strided_slice %77 {offsets = [0, 64], sizes = [8, 32], strides = [1, 1]} : vector<8x128xf32> to vector<8x32xf32>
    %81 = vector.extract_strided_slice %76 {offsets = [0, 96], sizes = [8, 32], strides = [1, 1]} : vector<8x128xf32> to vector<8x32xf32>
    %82 = arith.mulf %79, %47 : vector<8x32xf32>
    %83 = arith.mulf %78, %80 : vector<8x32xf32>
    %84 = arith.addf %82, %83 : vector<8x32xf32>
    %85 = math.tanh %84 : vector<8x32xf32>
    %86 = arith.mulf %81, %85 : vector<8x32xf32>
    %87 = vector.extract_strided_slice %5 {offsets = [16, 0], sizes = [8, 128], strides = [1, 1]} : vector<64x128xf32> to vector<8x128xf32>
    %cst_23 = arith.constant dense<0.000000e+00> : vector<8x128xf32>
    %88 = tpu.matmul %67, %6, %cst_23 {dimension_numbers = #tpu.dot_dimension_numbers<[1], [0], [0], [1], [0, 0, 1, 1], [], []>} : vector<8x32xf32>, vector<32x128xf32>, vector<8x128xf32> -> vector<8x128xf32>
    %89 = arith.addf %87, %88 : vector<8x128xf32>
    %90 = arith.negf %89 : vector<8x128xf32>
    %91 = math.exp %90 : vector<8x128xf32>
    %cst_24 = arith.constant 1.000000e+00 : f32
    %92 = vector.broadcast %cst_24 : f32 to vector<8x128xf32>
    %93 = arith.addf %92, %91 : vector<8x128xf32>
    %94 = arith.divf %92, %93 : vector<8x128xf32>
    %95 = math.tanh %89 : vector<8x128xf32>
    %96 = vector.extract_strided_slice %94 {offsets = [0, 0], sizes = [8, 32], strides = [1, 1]} : vector<8x128xf32> to vector<8x32xf32>
    %97 = vector.extract_strided_slice %94 {offsets = [0, 32], sizes = [8, 32], strides = [1, 1]} : vector<8x128xf32> to vector<8x32xf32>
    %98 = vector.extract_strided_slice %95 {offsets = [0, 64], sizes = [8, 32], strides = [1, 1]} : vector<8x128xf32> to vector<8x32xf32>
    %99 = vector.extract_strided_slice %94 {offsets = [0, 96], sizes = [8, 32], strides = [1, 1]} : vector<8x128xf32> to vector<8x32xf32>
    %100 = arith.mulf %97, %65 : vector<8x32xf32>
    %101 = arith.mulf %96, %98 : vector<8x32xf32>
    %102 = arith.addf %100, %101 : vector<8x32xf32>
    %103 = math.tanh %102 : vector<8x32xf32>
    %104 = arith.mulf %99, %103 : vector<8x32xf32>
    %105 = tpu.concatenate %104, %86 in 1 : vector<8x32xf32>, vector<8x32xf32> -> vector<8x64xf32>
    %cst_25 = arith.constant dense<0.000000e+00> : vector<8x128xf32>
    %106 = tpu.matmul %105, %7, %cst_25 {dimension_numbers = #tpu.dot_dimension_numbers<[1], [0], [0], [1], [0, 0, 1, 1], [], []>} : vector<8x64xf32>, vector<64x128xf32>, vector<8x128xf32> -> vector<8x128xf32>
    %107 = vector.broadcast %8 : vector<1x128xf32> to vector<8x128xf32>
    %108 = arith.addf %106, %107 : vector<8x128xf32>
    %109 = arith.negf %108 : vector<8x128xf32>
    %110 = math.exp %109 : vector<8x128xf32>
    %cst_26 = arith.constant 1.000000e+00 : f32
    %111 = vector.broadcast %cst_26 : f32 to vector<8x128xf32>
    %112 = arith.addf %111, %110 : vector<8x128xf32>
    %113 = arith.divf %111, %112 : vector<8x128xf32>
    %114 = math.tanh %108 : vector<8x128xf32>
    %115 = vector.extract_strided_slice %113 {offsets = [0, 0], sizes = [8, 32], strides = [1, 1]} : vector<8x128xf32> to vector<8x32xf32>
    %116 = vector.extract_strided_slice %113 {offsets = [0, 32], sizes = [8, 32], strides = [1, 1]} : vector<8x128xf32> to vector<8x32xf32>
    %117 = vector.extract_strided_slice %114 {offsets = [0, 64], sizes = [8, 32], strides = [1, 1]} : vector<8x128xf32> to vector<8x32xf32>
    %118 = vector.extract_strided_slice %113 {offsets = [0, 96], sizes = [8, 32], strides = [1, 1]} : vector<8x128xf32> to vector<8x32xf32>
    %119 = arith.mulf %116, %84 : vector<8x32xf32>
    %120 = arith.mulf %115, %117 : vector<8x32xf32>
    %121 = arith.addf %119, %120 : vector<8x32xf32>
    %122 = math.tanh %121 : vector<8x32xf32>
    %123 = arith.mulf %118, %122 : vector<8x32xf32>
    %124 = vector.extract_strided_slice %5 {offsets = [24, 0], sizes = [8, 128], strides = [1, 1]} : vector<64x128xf32> to vector<8x128xf32>
    %cst_27 = arith.constant dense<0.000000e+00> : vector<8x128xf32>
    %125 = tpu.matmul %104, %6, %cst_27 {dimension_numbers = #tpu.dot_dimension_numbers<[1], [0], [0], [1], [0, 0, 1, 1], [], []>} : vector<8x32xf32>, vector<32x128xf32>, vector<8x128xf32> -> vector<8x128xf32>
    %126 = arith.addf %124, %125 : vector<8x128xf32>
    %127 = arith.negf %126 : vector<8x128xf32>
    %128 = math.exp %127 : vector<8x128xf32>
    %cst_28 = arith.constant 1.000000e+00 : f32
    %129 = vector.broadcast %cst_28 : f32 to vector<8x128xf32>
    %130 = arith.addf %129, %128 : vector<8x128xf32>
    %131 = arith.divf %129, %130 : vector<8x128xf32>
    %132 = math.tanh %126 : vector<8x128xf32>
    %133 = vector.extract_strided_slice %131 {offsets = [0, 0], sizes = [8, 32], strides = [1, 1]} : vector<8x128xf32> to vector<8x32xf32>
    %134 = vector.extract_strided_slice %131 {offsets = [0, 32], sizes = [8, 32], strides = [1, 1]} : vector<8x128xf32> to vector<8x32xf32>
    %135 = vector.extract_strided_slice %132 {offsets = [0, 64], sizes = [8, 32], strides = [1, 1]} : vector<8x128xf32> to vector<8x32xf32>
    %136 = vector.extract_strided_slice %131 {offsets = [0, 96], sizes = [8, 32], strides = [1, 1]} : vector<8x128xf32> to vector<8x32xf32>
    %137 = arith.mulf %134, %102 : vector<8x32xf32>
    %138 = arith.mulf %133, %135 : vector<8x32xf32>
    %139 = arith.addf %137, %138 : vector<8x32xf32>
    %140 = math.tanh %139 : vector<8x32xf32>
    %141 = arith.mulf %136, %140 : vector<8x32xf32>
    %142 = tpu.concatenate %141, %123 in 1 : vector<8x32xf32>, vector<8x32xf32> -> vector<8x64xf32>
    %cst_29 = arith.constant dense<0.000000e+00> : vector<8x128xf32>
    %143 = tpu.matmul %142, %7, %cst_29 {dimension_numbers = #tpu.dot_dimension_numbers<[1], [0], [0], [1], [0, 0, 1, 1], [], []>} : vector<8x64xf32>, vector<64x128xf32>, vector<8x128xf32> -> vector<8x128xf32>
    %144 = vector.broadcast %8 : vector<1x128xf32> to vector<8x128xf32>
    %145 = arith.addf %143, %144 : vector<8x128xf32>
    %146 = arith.negf %145 : vector<8x128xf32>
    %147 = math.exp %146 : vector<8x128xf32>
    %cst_30 = arith.constant 1.000000e+00 : f32
    %148 = vector.broadcast %cst_30 : f32 to vector<8x128xf32>
    %149 = arith.addf %148, %147 : vector<8x128xf32>
    %150 = arith.divf %148, %149 : vector<8x128xf32>
    %151 = math.tanh %145 : vector<8x128xf32>
    %152 = vector.extract_strided_slice %150 {offsets = [0, 0], sizes = [8, 32], strides = [1, 1]} : vector<8x128xf32> to vector<8x32xf32>
    %153 = vector.extract_strided_slice %150 {offsets = [0, 32], sizes = [8, 32], strides = [1, 1]} : vector<8x128xf32> to vector<8x32xf32>
    %154 = vector.extract_strided_slice %151 {offsets = [0, 64], sizes = [8, 32], strides = [1, 1]} : vector<8x128xf32> to vector<8x32xf32>
    %155 = vector.extract_strided_slice %150 {offsets = [0, 96], sizes = [8, 32], strides = [1, 1]} : vector<8x128xf32> to vector<8x32xf32>
    %156 = arith.mulf %153, %121 : vector<8x32xf32>
    %157 = arith.mulf %152, %154 : vector<8x32xf32>
    %158 = arith.addf %156, %157 : vector<8x32xf32>
    %159 = math.tanh %158 : vector<8x32xf32>
    %160 = arith.mulf %155, %159 : vector<8x32xf32>
    %161 = vector.extract_strided_slice %5 {offsets = [32, 0], sizes = [8, 128], strides = [1, 1]} : vector<64x128xf32> to vector<8x128xf32>
    %cst_31 = arith.constant dense<0.000000e+00> : vector<8x128xf32>
    %162 = tpu.matmul %141, %6, %cst_31 {dimension_numbers = #tpu.dot_dimension_numbers<[1], [0], [0], [1], [0, 0, 1, 1], [], []>} : vector<8x32xf32>, vector<32x128xf32>, vector<8x128xf32> -> vector<8x128xf32>
    %163 = arith.addf %161, %162 : vector<8x128xf32>
    %164 = arith.negf %163 : vector<8x128xf32>
    %165 = math.exp %164 : vector<8x128xf32>
    %cst_32 = arith.constant 1.000000e+00 : f32
    %166 = vector.broadcast %cst_32 : f32 to vector<8x128xf32>
    %167 = arith.addf %166, %165 : vector<8x128xf32>
    %168 = arith.divf %166, %167 : vector<8x128xf32>
    %169 = math.tanh %163 : vector<8x128xf32>
    %170 = vector.extract_strided_slice %168 {offsets = [0, 0], sizes = [8, 32], strides = [1, 1]} : vector<8x128xf32> to vector<8x32xf32>
    %171 = vector.extract_strided_slice %168 {offsets = [0, 32], sizes = [8, 32], strides = [1, 1]} : vector<8x128xf32> to vector<8x32xf32>
    %172 = vector.extract_strided_slice %169 {offsets = [0, 64], sizes = [8, 32], strides = [1, 1]} : vector<8x128xf32> to vector<8x32xf32>
    %173 = vector.extract_strided_slice %168 {offsets = [0, 96], sizes = [8, 32], strides = [1, 1]} : vector<8x128xf32> to vector<8x32xf32>
    %174 = arith.mulf %171, %139 : vector<8x32xf32>
    %175 = arith.mulf %170, %172 : vector<8x32xf32>
    %176 = arith.addf %174, %175 : vector<8x32xf32>
    %177 = math.tanh %176 : vector<8x32xf32>
    %178 = arith.mulf %173, %177 : vector<8x32xf32>
    %179 = tpu.concatenate %178, %160 in 1 : vector<8x32xf32>, vector<8x32xf32> -> vector<8x64xf32>
    %cst_33 = arith.constant dense<0.000000e+00> : vector<8x128xf32>
    %180 = tpu.matmul %179, %7, %cst_33 {dimension_numbers = #tpu.dot_dimension_numbers<[1], [0], [0], [1], [0, 0, 1, 1], [], []>} : vector<8x64xf32>, vector<64x128xf32>, vector<8x128xf32> -> vector<8x128xf32>
    %181 = vector.broadcast %8 : vector<1x128xf32> to vector<8x128xf32>
    %182 = arith.addf %180, %181 : vector<8x128xf32>
    %183 = arith.negf %182 : vector<8x128xf32>
    %184 = math.exp %183 : vector<8x128xf32>
    %cst_34 = arith.constant 1.000000e+00 : f32
    %185 = vector.broadcast %cst_34 : f32 to vector<8x128xf32>
    %186 = arith.addf %185, %184 : vector<8x128xf32>
    %187 = arith.divf %185, %186 : vector<8x128xf32>
    %188 = math.tanh %182 : vector<8x128xf32>
    %189 = vector.extract_strided_slice %187 {offsets = [0, 0], sizes = [8, 32], strides = [1, 1]} : vector<8x128xf32> to vector<8x32xf32>
    %190 = vector.extract_strided_slice %187 {offsets = [0, 32], sizes = [8, 32], strides = [1, 1]} : vector<8x128xf32> to vector<8x32xf32>
    %191 = vector.extract_strided_slice %188 {offsets = [0, 64], sizes = [8, 32], strides = [1, 1]} : vector<8x128xf32> to vector<8x32xf32>
    %192 = vector.extract_strided_slice %187 {offsets = [0, 96], sizes = [8, 32], strides = [1, 1]} : vector<8x128xf32> to vector<8x32xf32>
    %193 = arith.mulf %190, %158 : vector<8x32xf32>
    %194 = arith.mulf %189, %191 : vector<8x32xf32>
    %195 = arith.addf %193, %194 : vector<8x32xf32>
    %196 = math.tanh %195 : vector<8x32xf32>
    %197 = arith.mulf %192, %196 : vector<8x32xf32>
    %198 = vector.extract_strided_slice %5 {offsets = [40, 0], sizes = [8, 128], strides = [1, 1]} : vector<64x128xf32> to vector<8x128xf32>
    %cst_35 = arith.constant dense<0.000000e+00> : vector<8x128xf32>
    %199 = tpu.matmul %178, %6, %cst_35 {dimension_numbers = #tpu.dot_dimension_numbers<[1], [0], [0], [1], [0, 0, 1, 1], [], []>} : vector<8x32xf32>, vector<32x128xf32>, vector<8x128xf32> -> vector<8x128xf32>
    %200 = arith.addf %198, %199 : vector<8x128xf32>
    %201 = arith.negf %200 : vector<8x128xf32>
    %202 = math.exp %201 : vector<8x128xf32>
    %cst_36 = arith.constant 1.000000e+00 : f32
    %203 = vector.broadcast %cst_36 : f32 to vector<8x128xf32>
    %204 = arith.addf %203, %202 : vector<8x128xf32>
    %205 = arith.divf %203, %204 : vector<8x128xf32>
    %206 = math.tanh %200 : vector<8x128xf32>
    %207 = vector.extract_strided_slice %205 {offsets = [0, 0], sizes = [8, 32], strides = [1, 1]} : vector<8x128xf32> to vector<8x32xf32>
    %208 = vector.extract_strided_slice %205 {offsets = [0, 32], sizes = [8, 32], strides = [1, 1]} : vector<8x128xf32> to vector<8x32xf32>
    %209 = vector.extract_strided_slice %206 {offsets = [0, 64], sizes = [8, 32], strides = [1, 1]} : vector<8x128xf32> to vector<8x32xf32>
    %210 = vector.extract_strided_slice %205 {offsets = [0, 96], sizes = [8, 32], strides = [1, 1]} : vector<8x128xf32> to vector<8x32xf32>
    %211 = arith.mulf %208, %176 : vector<8x32xf32>
    %212 = arith.mulf %207, %209 : vector<8x32xf32>
    %213 = arith.addf %211, %212 : vector<8x32xf32>
    %214 = math.tanh %213 : vector<8x32xf32>
    %215 = arith.mulf %210, %214 : vector<8x32xf32>
    %216 = tpu.concatenate %215, %197 in 1 : vector<8x32xf32>, vector<8x32xf32> -> vector<8x64xf32>
    %cst_37 = arith.constant dense<0.000000e+00> : vector<8x128xf32>
    %217 = tpu.matmul %216, %7, %cst_37 {dimension_numbers = #tpu.dot_dimension_numbers<[1], [0], [0], [1], [0, 0, 1, 1], [], []>} : vector<8x64xf32>, vector<64x128xf32>, vector<8x128xf32> -> vector<8x128xf32>
    %218 = vector.broadcast %8 : vector<1x128xf32> to vector<8x128xf32>
    %219 = arith.addf %217, %218 : vector<8x128xf32>
    %220 = arith.negf %219 : vector<8x128xf32>
    %221 = math.exp %220 : vector<8x128xf32>
    %cst_38 = arith.constant 1.000000e+00 : f32
    %222 = vector.broadcast %cst_38 : f32 to vector<8x128xf32>
    %223 = arith.addf %222, %221 : vector<8x128xf32>
    %224 = arith.divf %222, %223 : vector<8x128xf32>
    %225 = math.tanh %219 : vector<8x128xf32>
    %226 = vector.extract_strided_slice %224 {offsets = [0, 0], sizes = [8, 32], strides = [1, 1]} : vector<8x128xf32> to vector<8x32xf32>
    %227 = vector.extract_strided_slice %224 {offsets = [0, 32], sizes = [8, 32], strides = [1, 1]} : vector<8x128xf32> to vector<8x32xf32>
    %228 = vector.extract_strided_slice %225 {offsets = [0, 64], sizes = [8, 32], strides = [1, 1]} : vector<8x128xf32> to vector<8x32xf32>
    %229 = vector.extract_strided_slice %224 {offsets = [0, 96], sizes = [8, 32], strides = [1, 1]} : vector<8x128xf32> to vector<8x32xf32>
    %230 = arith.mulf %227, %195 : vector<8x32xf32>
    %231 = arith.mulf %226, %228 : vector<8x32xf32>
    %232 = arith.addf %230, %231 : vector<8x32xf32>
    %233 = math.tanh %232 : vector<8x32xf32>
    %234 = arith.mulf %229, %233 : vector<8x32xf32>
    %235 = vector.extract_strided_slice %5 {offsets = [48, 0], sizes = [8, 128], strides = [1, 1]} : vector<64x128xf32> to vector<8x128xf32>
    %cst_39 = arith.constant dense<0.000000e+00> : vector<8x128xf32>
    %236 = tpu.matmul %215, %6, %cst_39 {dimension_numbers = #tpu.dot_dimension_numbers<[1], [0], [0], [1], [0, 0, 1, 1], [], []>} : vector<8x32xf32>, vector<32x128xf32>, vector<8x128xf32> -> vector<8x128xf32>
    %237 = arith.addf %235, %236 : vector<8x128xf32>
    %238 = arith.negf %237 : vector<8x128xf32>
    %239 = math.exp %238 : vector<8x128xf32>
    %cst_40 = arith.constant 1.000000e+00 : f32
    %240 = vector.broadcast %cst_40 : f32 to vector<8x128xf32>
    %241 = arith.addf %240, %239 : vector<8x128xf32>
    %242 = arith.divf %240, %241 : vector<8x128xf32>
    %243 = math.tanh %237 : vector<8x128xf32>
    %244 = vector.extract_strided_slice %242 {offsets = [0, 0], sizes = [8, 32], strides = [1, 1]} : vector<8x128xf32> to vector<8x32xf32>
    %245 = vector.extract_strided_slice %242 {offsets = [0, 32], sizes = [8, 32], strides = [1, 1]} : vector<8x128xf32> to vector<8x32xf32>
    %246 = vector.extract_strided_slice %243 {offsets = [0, 64], sizes = [8, 32], strides = [1, 1]} : vector<8x128xf32> to vector<8x32xf32>
    %247 = vector.extract_strided_slice %242 {offsets = [0, 96], sizes = [8, 32], strides = [1, 1]} : vector<8x128xf32> to vector<8x32xf32>
    %248 = arith.mulf %245, %213 : vector<8x32xf32>
    %249 = arith.mulf %244, %246 : vector<8x32xf32>
    %250 = arith.addf %248, %249 : vector<8x32xf32>
    %251 = math.tanh %250 : vector<8x32xf32>
    %252 = arith.mulf %247, %251 : vector<8x32xf32>
    %253 = tpu.concatenate %252, %234 in 1 : vector<8x32xf32>, vector<8x32xf32> -> vector<8x64xf32>
    %cst_41 = arith.constant dense<0.000000e+00> : vector<8x128xf32>
    %254 = tpu.matmul %253, %7, %cst_41 {dimension_numbers = #tpu.dot_dimension_numbers<[1], [0], [0], [1], [0, 0, 1, 1], [], []>} : vector<8x64xf32>, vector<64x128xf32>, vector<8x128xf32> -> vector<8x128xf32>
    %255 = vector.broadcast %8 : vector<1x128xf32> to vector<8x128xf32>
    %256 = arith.addf %254, %255 : vector<8x128xf32>
    %257 = arith.negf %256 : vector<8x128xf32>
    %258 = math.exp %257 : vector<8x128xf32>
    %cst_42 = arith.constant 1.000000e+00 : f32
    %259 = vector.broadcast %cst_42 : f32 to vector<8x128xf32>
    %260 = arith.addf %259, %258 : vector<8x128xf32>
    %261 = arith.divf %259, %260 : vector<8x128xf32>
    %262 = math.tanh %256 : vector<8x128xf32>
    %263 = vector.extract_strided_slice %261 {offsets = [0, 0], sizes = [8, 32], strides = [1, 1]} : vector<8x128xf32> to vector<8x32xf32>
    %264 = vector.extract_strided_slice %261 {offsets = [0, 32], sizes = [8, 32], strides = [1, 1]} : vector<8x128xf32> to vector<8x32xf32>
    %265 = vector.extract_strided_slice %262 {offsets = [0, 64], sizes = [8, 32], strides = [1, 1]} : vector<8x128xf32> to vector<8x32xf32>
    %266 = vector.extract_strided_slice %261 {offsets = [0, 96], sizes = [8, 32], strides = [1, 1]} : vector<8x128xf32> to vector<8x32xf32>
    %267 = arith.mulf %264, %232 : vector<8x32xf32>
    %268 = arith.mulf %263, %265 : vector<8x32xf32>
    %269 = arith.addf %267, %268 : vector<8x32xf32>
    %270 = math.tanh %269 : vector<8x32xf32>
    %271 = arith.mulf %266, %270 : vector<8x32xf32>
    %272 = vector.extract_strided_slice %5 {offsets = [56, 0], sizes = [8, 128], strides = [1, 1]} : vector<64x128xf32> to vector<8x128xf32>
    %cst_43 = arith.constant dense<0.000000e+00> : vector<8x128xf32>
    %273 = tpu.matmul %252, %6, %cst_43 {dimension_numbers = #tpu.dot_dimension_numbers<[1], [0], [0], [1], [0, 0, 1, 1], [], []>} : vector<8x32xf32>, vector<32x128xf32>, vector<8x128xf32> -> vector<8x128xf32>
    %274 = arith.addf %272, %273 : vector<8x128xf32>
    %275 = arith.negf %274 : vector<8x128xf32>
    %276 = math.exp %275 : vector<8x128xf32>
    %cst_44 = arith.constant 1.000000e+00 : f32
    %277 = vector.broadcast %cst_44 : f32 to vector<8x128xf32>
    %278 = arith.addf %277, %276 : vector<8x128xf32>
    %279 = arith.divf %277, %278 : vector<8x128xf32>
    %280 = math.tanh %274 : vector<8x128xf32>
    %281 = vector.extract_strided_slice %279 {offsets = [0, 0], sizes = [8, 32], strides = [1, 1]} : vector<8x128xf32> to vector<8x32xf32>
    %282 = vector.extract_strided_slice %279 {offsets = [0, 32], sizes = [8, 32], strides = [1, 1]} : vector<8x128xf32> to vector<8x32xf32>
    %283 = vector.extract_strided_slice %280 {offsets = [0, 64], sizes = [8, 32], strides = [1, 1]} : vector<8x128xf32> to vector<8x32xf32>
    %284 = vector.extract_strided_slice %279 {offsets = [0, 96], sizes = [8, 32], strides = [1, 1]} : vector<8x128xf32> to vector<8x32xf32>
    %285 = arith.mulf %282, %250 : vector<8x32xf32>
    %286 = arith.mulf %281, %283 : vector<8x32xf32>
    %287 = arith.addf %285, %286 : vector<8x32xf32>
    %288 = math.tanh %287 : vector<8x32xf32>
    %289 = arith.mulf %284, %288 : vector<8x32xf32>
    %290 = tpu.concatenate %289, %271 in 1 : vector<8x32xf32>, vector<8x32xf32> -> vector<8x64xf32>
    %cst_45 = arith.constant dense<0.000000e+00> : vector<8x128xf32>
    %291 = tpu.matmul %290, %7, %cst_45 {dimension_numbers = #tpu.dot_dimension_numbers<[1], [0], [0], [1], [0, 0, 1, 1], [], []>} : vector<8x64xf32>, vector<64x128xf32>, vector<8x128xf32> -> vector<8x128xf32>
    %292 = vector.broadcast %8 : vector<1x128xf32> to vector<8x128xf32>
    %293 = arith.addf %291, %292 : vector<8x128xf32>
    %294 = arith.negf %293 : vector<8x128xf32>
    %295 = math.exp %294 : vector<8x128xf32>
    %cst_46 = arith.constant 1.000000e+00 : f32
    %296 = vector.broadcast %cst_46 : f32 to vector<8x128xf32>
    %297 = arith.addf %296, %295 : vector<8x128xf32>
    %298 = arith.divf %296, %297 : vector<8x128xf32>
    %299 = math.tanh %293 : vector<8x128xf32>
    %300 = vector.extract_strided_slice %298 {offsets = [0, 0], sizes = [8, 32], strides = [1, 1]} : vector<8x128xf32> to vector<8x32xf32>
    %301 = vector.extract_strided_slice %298 {offsets = [0, 32], sizes = [8, 32], strides = [1, 1]} : vector<8x128xf32> to vector<8x32xf32>
    %302 = vector.extract_strided_slice %299 {offsets = [0, 64], sizes = [8, 32], strides = [1, 1]} : vector<8x128xf32> to vector<8x32xf32>
    %303 = vector.extract_strided_slice %298 {offsets = [0, 96], sizes = [8, 32], strides = [1, 1]} : vector<8x128xf32> to vector<8x32xf32>
    %304 = arith.mulf %301, %269 : vector<8x32xf32>
    %305 = arith.mulf %300, %302 : vector<8x32xf32>
    %306 = arith.addf %304, %305 : vector<8x32xf32>
    %307 = math.tanh %306 : vector<8x32xf32>
    %308 = arith.mulf %303, %307 : vector<8x32xf32>
    %c0_47 = arith.constant 0 : index
    %c0_48 = arith.constant 0 : index
    %309 = vector.load %arg6[%c0_47, %c0_48] : memref<8x32xf32, #tpu.memory_space<vmem>>, vector<8x32xf32>
    tpu.vector_store %arg6[%c0_47, %c0_48], %308 {strides = array<i32>} : memref<8x32xf32, #tpu.memory_space<vmem>>, vector<8x32xf32>,
    return
  }
}

</mosaic_0001>

<llo_original>
// kernel: lstm_forward.1
$region0: #{lstm_forward.1}
  #allocation0 [shape = 'u32[]', space=smem, size = 0x4, offset = 0x4, fixed_abs, tag = 'smem constant byte address 0x4 - core index']
  #allocation1 [shape = 'u32[144,128]{1,0:T(1,128)}', space=vmem, size = 0x12000, scoped, tag = 'internal scratch']
  %s0 = inlined_call_operand.vmem [shape: f32[64,6], index: 0, kind: input, shape index: {}]
  %s1 = inlined_call_operand.vmem [shape: f32[6,128], index: 1, kind: input, shape index: {}]
  %s2 = inlined_call_operand.vmem [shape: f32[32,128], index: 2, kind: input, shape index: {}]
  %s3 = inlined_call_operand.vmem [shape: f32[1,128], index: 3, kind: input, shape index: {}]
  %s4 = inlined_call_operand.vmem [shape: f32[64,128], index: 4, kind: input, shape index: {}]
  %s5 = inlined_call_operand.vmem [shape: f32[1,128], index: 5, kind: input, shape index: {}]
  %s6 = inlined_call_operand.vmem [shape: f32[8,32], index: 6, kind: output, shape index: {}]
  %s7 = sld [smem:[#allocation0]]
  $region34: #{lstm_forward.1} parent=0
    _
  %s9 = ssub.s32 1, %s7
  %s10 = scalar_select 0, %s9, %s7
  // Predicated region
  $region2: #{lstm_forward.1} parent=0 // pred_check
    _
  $region3: #{lstm_forward.1} parent=0 // pred_check_branch
    %12 = sbr.rel (0) target = $region5
  $region4: #{lstm_forward.1} parent=0 // pred_region
    _
  $region5: #{lstm_forward.1} parent=0 // pred_fallthru
    _
  // Predicated region
  $region6: #{lstm_forward.1} parent=0 // pred_check
    _
  $region7: #{lstm_forward.1} parent=0 // pred_check_branch
    %14 = sbr.rel (0) target = $region9
  $region8: #{lstm_forward.1} parent=0 // pred_region
    _
  $region9: #{lstm_forward.1} parent=0 // pred_fallthru
    _
  // Predicated region
  $region10: #{lstm_forward.1} parent=0 // pred_check
    _
  $region11: #{lstm_forward.1} parent=0 // pred_check_branch
    %16 = sbr.rel (0) target = $region13
  $region12: #{lstm_forward.1} parent=0 // pred_region
    _
  $region13: #{lstm_forward.1} parent=0 // pred_fallthru
    _
  // Predicated region
  $region14: #{lstm_forward.1} parent=0 // pred_check
    _
  $region15: #{lstm_forward.1} parent=0 // pred_check_branch
    %18 = sbr.rel (0) target = $region17
  $region16: #{lstm_forward.1} parent=0 // pred_region
    _
  $region17: #{lstm_forward.1} parent=0 // pred_fallthru
    _
  // Predicated region
  $region18: #{lstm_forward.1} parent=0 // pred_check
    _
  $region19: #{lstm_forward.1} parent=0 // pred_check_branch
    %20 = sbr.rel (0) target = $region21
  $region20: #{lstm_forward.1} parent=0 // pred_region
    _
  $region21: #{lstm_forward.1} parent=0 // pred_fallthru
    _
  // Predicated region
  $region22: #{lstm_forward.1} parent=0 // pred_check
    _
  $region23: #{lstm_forward.1} parent=0 // pred_check_branch
    %22 = sbr.rel (0) target = $region25
  $region24: #{lstm_forward.1} parent=0 // pred_region
    _
  $region25: #{lstm_forward.1} parent=0 // pred_fallthru
    _
  %v23 = vld [vmem:[%s0] sm:$0xff]
  %v24 = vld [vmem:[%s0 + $0x8] sm:$0xff]
  %v25 = vld [vmem:[%s0 + $0x10] sm:$0xff]
  %v26 = vld [vmem:[%s0 + $0x18] sm:$0xff]
  %v27 = vld [vmem:[%s0 + $0x20] sm:$0xff]
  %v28 = vld [vmem:[%s0 + $0x28] sm:$0xff]
  %v29 = vld [vmem:[%s0 + $0x30] sm:$0xff]
  %v30 = vld [vmem:[%s0 + $0x38] sm:$0xff]
  %v31 = vld [vmem:[%s1] sm:$0x3f]
  %v32 = vld [vmem:[%s3] sm:$0x1]
  %v34 = vlaneseq
  %v35 = vshrl.u32 %v34, 7
  %v36 = vsub.s32 0, %v35
  %v37 = vrot.slane %v32, %v36
  %vm39 = vcmask 48128
  %v41 = vsel %vm39, %v23, 0
  %v44 = vsel %vm39, %v24, 0
  %v47 = vsel %vm39, %v25, 0
  %v50 = vsel %vm39, %v26, 0
  %v53 = vsel %vm39, %v27, 0
  %v56 = vsel %vm39, %v28, 0
  %v59 = vsel %vm39, %v29, 0
  %v62 = vsel %vm39, %v30, 0
  %vm64 = vcmask 1045504
  %v66 = vsel %vm64, %v31, 0
  %68 = vmatprep.subr.mxu0 0.0
  %69 = vmatpush1.msra.mxu0 0.0
  %70 = vmatprep.subr.mxu0 0.0
  %71 = vmatpush1.msra.mxu0 0.0
  %72 = vmatprep.subr.mxu0 0.0
  %73 = vmatpush1.msra.mxu0 0.0
  %74 = vmatprep.subr.mxu0 0.0
  %75 = vmatpush1.msra.mxu0 0.0
  %76 = vmatprep.subr.mxu0 0.0
  %77 = vmatpush1.msra.mxu0 0.0
  %78 = vmatprep.subr.mxu0 0.0
  %79 = vmatpush1.msra.mxu0 0.0
  %80 = vmatprep.subr.mxu0 0.0
  %81 = vmatpush1.msra.mxu0 0.0
  %82 = vmatprep.subr.mxu0 0.0
  %83 = vmatpush1.msra.mxu0 0.0
  %84 = vmatprep.subr.mxu0 0.0
  %85 = vmatpush1.msra.mxu0 0.0
  %86 = vmatprep.subr.mxu0 0.0
  %87 = vmatpush1.msra.mxu0 0.0
  %88 = vmatprep.subr.mxu0 0.0
  %89 = vmatpush1.msra.mxu0 0.0
  %90 = vmatprep.subr.mxu0 0.0
  %91 = vmatpush1.msra.mxu0 0.0
  %92 = vmatprep.subr.mxu0 0.0
  %93 = vmatpush1.msra.mxu0 0.0
  %94 = vmatprep.subr.mxu0 0.0
  %95 = vmatpush1.msra.mxu0 0.0
  %96 = vmatprep.subr.mxu0 0.0
  %97 = vmatpush1.msra.mxu0 0.0
  %98 = vmatprep.subr.mxu0 0.0
  %99 = vmatpush1.msra.mxu0 %v66
  %100 = vmatprep.subr.mxu0 0.0
  %101 = vmatpush2.msra.mxu0 0.0
  %102 = vmatprep.subr.mxu0 0.0
  %103 = vmatpush2.msra.mxu0 0.0
  %104 = vmatprep.subr.mxu0 0.0
  %105 = vmatpush2.msra.mxu0 0.0
  %106 = vmatprep.subr.mxu0 0.0
  %107 = vmatpush2.msra.mxu0 0.0
  %108 = vmatprep.subr.mxu0 0.0
  %109 = vmatpush2.msra.mxu0 0.0
  %110 = vmatprep.subr.mxu0 0.0
  %111 = vmatpush2.msra.mxu0 0.0
  %112 = vmatprep.subr.mxu0 0.0
  %113 = vmatpush2.msra.mxu0 0.0
  %114 = vmatprep.subr.mxu0 0.0
  %115 = vmatpush2.msra.mxu0 0.0
  %116 = vmatprep.subr.mxu0 0.0
  %117 = vmatpush2.msra.mxu0 0.0
  %118 = vmatprep.subr.mxu0 0.0
  %119 = vmatpush2.msra.mxu0 0.0
  %120 = vmatprep.subr.mxu0 0.0
  %121 = vmatpush2.msra.mxu0 0.0
  %122 = vmatprep.subr.mxu0 0.0
  %123 = vmatpush2.msra.mxu0 0.0
  %124 = vmatprep.subr.mxu0 0.0
  %125 = vmatpush2.msra.mxu0 0.0
  %126 = vmatprep.subr.mxu0 0.0
  %127 = vmatpush2.msra.mxu0 0.0
  %128 = vmatprep.subr.mxu0 0.0
  %129 = vmatpush2.msra.mxu0 0.0
  %130 = vmatprep.subr.mxu0 0.0
  %131 = vmatpush2.msra.mxu0 0.0
  %132 = vmatprep.mubr.f32.mxu0 0.0
  %133 = vmatmul.mubr.f32.gmra.mxu0 %v41
  %v134 = vpop.f32.mrf.mxu0
  %v135 = vadd.f32 %v37, %v134
  %v136 = vpop.f32.mrf.mxu0
  %137 = vmatprep.mubr.f32.mxu0 0.0
  %138 = vmatmul.mubr.f32.gmra.mxu0 %v44
  %v139 = vpop.f32.mrf.mxu0
  %v140 = vadd.f32 %v37, %v139
  %v141 = vpop.f32.mrf.mxu0
  %142 = vmatprep.mubr.f32.mxu0 0.0
  %143 = vmatmul.mubr.f32.gmra.mxu0 %v47
  %v144 = vpop.f32.mrf.mxu0
  %v145 = vadd.f32 %v37, %v144
  %v146 = vpop.f32.mrf.mxu0
  %147 = vmatprep.mubr.f32.mxu0 0.0
  %148 = vmatmul.mubr.f32.gmra.mxu0 %v50
  %v149 = vpop.f32.mrf.mxu0
  %v150 = vadd.f32 %v37, %v149
  %v151 = vpop.f32.mrf.mxu0
  %152 = vmatprep.mubr.f32.mxu0 0.0
  %153 = vmatmul.mubr.f32.gmra.mxu0 %v53
  %v154 = vpop.f32.mrf.mxu0
  %v155 = vadd.f32 %v37, %v154
  %v156 = vpop.f32.mrf.mxu0
  %157 = vmatprep.mubr.f32.mxu0 0.0
  %158 = vmatmul.mubr.f32.gmra.mxu0 %v56
  %v159 = vpop.f32.mrf.mxu0
  %v160 = vadd.f32 %v37, %v159
  %v161 = vpop.f32.mrf.mxu0
  %162 = vmatprep.mubr.f32.mxu0 0.0
  %163 = vmatmul.mubr.f32.gmra.mxu0 %v59
  %v164 = vpop.f32.mrf.mxu0
  %v165 = vadd.f32 %v37, %v164
  %v166 = vpop.f32.mrf.mxu0
  %167 = vmatprep.mubr.f32.mxu0 0.0
  %168 = vmatmul.mubr.f32.gmra.mxu0 %v62
  %v169 = vpop.f32.mrf.mxu0
  %v170 = vadd.f32 %v37, %v169
  %v171 = vpop.f32.mrf.mxu0
  %172 = vdwg.mxu0
  %v173 = vld [vmem:[%s2] sm:$0xff]
  %v174 = vld [vmem:[%s2 + $0x8] sm:$0xff]
  %v175 = vld [vmem:[%s2 + $0x10] sm:$0xff]
  %v176 = vld [vmem:[%s2 + $0x18] sm:$0xff]
  %v177 = vld [vmem:[%s4] sm:$0xff]
  %v178 = vld [vmem:[%s4 + $0x8] sm:$0xff]
  %v179 = vld [vmem:[%s4 + $0x10] sm:$0xff]
  %v180 = vld [vmem:[%s4 + $0x18] sm:$0xff]
  %v181 = vld [vmem:[%s4 + $0x20] sm:$0xff]
  %v182 = vld [vmem:[%s4 + $0x28] sm:$0xff]
  %v183 = vld [vmem:[%s4 + $0x30] sm:$0xff]
  %v184 = vld [vmem:[%s4 + $0x38] sm:$0xff]
  %v185 = vld [vmem:[%s5] sm:$0x1]
  %vm186 = vcmask 261120
  %v188 = vsel %vm186, 0.0, 0
  %190 = vmatprep.subr.mxu0 0.0
  %191 = vmatpush1.msra.mxu0 0.0
  %192 = vmatprep.subr.mxu0 0.0
  %193 = vmatpush1.msra.mxu0 0.0
  %194 = vmatprep.subr.mxu0 0.0
  %195 = vmatpush1.msra.mxu0 0.0
  %196 = vmatprep.subr.mxu0 0.0
  %197 = vmatpush1.msra.mxu0 0.0
  %198 = vmatprep.subr.mxu0 0.0
  %199 = vmatpush1.msra.mxu0 0.0
  %200 = vmatprep.subr.mxu0 0.0
  %201 = vmatpush1.msra.mxu0 0.0
  %202 = vmatprep.subr.mxu0 0.0
  %203 = vmatpush1.msra.mxu0 0.0
  %204 = vmatprep.subr.mxu0 0.0
  %205 = vmatpush1.msra.mxu0 0.0
  %206 = vmatprep.subr.mxu0 0.0
  %207 = vmatpush1.msra.mxu0 0.0
  %208 = vmatprep.subr.mxu0 0.0
  %209 = vmatpush1.msra.mxu0 0.0
  %210 = vmatprep.subr.mxu0 0.0
  %211 = vmatpush1.msra.mxu0 0.0
  %212 = vmatprep.subr.mxu0 0.0
  %213 = vmatpush1.msra.mxu0 0.0
  %214 = vmatprep.subr.mxu0 0.0
  %215 = vmatpush1.msra.mxu0 %v176
  %216 = vmatprep.subr.mxu0 0.0
  %217 = vmatpush1.msra.mxu0 %v175
  %218 = vmatprep.subr.mxu0 0.0
  %219 = vmatpush1.msra.mxu0 %v174
  %220 = vmatprep.subr.mxu0 0.0
  %221 = vmatpush1.msra.mxu0 %v173
  %222 = vmatprep.subr.mxu0 0.0
  %223 = vmatpush2.msra.mxu0 0.0
  %224 = vmatprep.subr.mxu0 0.0
  %225 = vmatpush2.msra.mxu0 0.0
  %226 = vmatprep.subr.mxu0 0.0
  %227 = vmatpush2.msra.mxu0 0.0
  %228 = vmatprep.subr.mxu0 0.0
  %229 = vmatpush2.msra.mxu0 0.0
  %230 = vmatprep.subr.mxu0 0.0
  %231 = vmatpush2.msra.mxu0 0.0
  %232 = vmatprep.subr.mxu0 0.0
  %233 = vmatpush2.msra.mxu0 0.0
  %234 = vmatprep.subr.mxu0 0.0
  %235 = vmatpush2.msra.mxu0 0.0
  %236 = vmatprep.subr.mxu0 0.0
  %237 = vmatpush2.msra.mxu0 0.0
  %238 = vmatprep.subr.mxu0 0.0
  %239 = vmatpush2.msra.mxu0 0.0
  %240 = vmatprep.subr.mxu0 0.0
  %241 = vmatpush2.msra.mxu0 0.0
  %242 = vmatprep.subr.mxu0 0.0
  %243 = vmatpush2.msra.mxu0 0.0
  %244 = vmatprep.subr.mxu0 0.0
  %245 = vmatpush2.msra.mxu0 0.0
  %246 = vmatprep.subr.mxu0 0.0
  %247 = vmatpush2.msra.mxu0 0.0
  %248 = vmatprep.subr.mxu0 0.0
  %249 = vmatpush2.msra.mxu0 0.0
  %250 = vmatprep.subr.mxu0 0.0
  %251 = vmatpush2.msra.mxu0 0.0
  %252 = vmatprep.subr.mxu0 0.0
  %253 = vmatpush2.msra.mxu0 0.0
  %254 = vmatprep.mubr.f32.mxu0 0.0
  %255 = vmatmul.mubr.f32.gmra.mxu0 %v188
  %v256 = vpop.f32.mrf.mxu0
  %v257 = vadd.f32 0.0, %v256
  %v258 = vpop.f32.mrf.mxu0
  %259 = vdwg.mxu0
  %v260 = vadd.f32 %v135, %v257
  %v261 = vxor.u32 %v260, 2147483648
  %v262 = vmul.f32 %v261, 1.442695
  %v263 = vpow.pop %v262
  %v264 = vadd.f32 %v263, 1.0
  %v265 = vrcp.pop %v264
  %v266 = vmul.f32 1.0, %v265
  %v267 = vtanh.pop %v260
  %v268 = vmul.f32 %v266, 0.0
  %270 = vrot.lane.b32.xlu0 %v267, 64
  %v271 = vpop.permute.xlu0 %270
  %v273 = vmul.f32 %v266, %v271
  %275 = vrot.lane.b32.xlu0 %v273, 32
  %v276 = vpop.permute.xlu0 %275
  %v278 = vadd.f32 %v268, %v276
  %v279 = vtanh.pop %v278
  %281 = vrot.lane.b32.xlu0 %v279, 64
  %v282 = vpop.permute.xlu0 %281
  %v284 = vmul.f32 %v266, %v282
  %286 = vrot.lane.b32.xlu0 %v284, 32
  %v287 = vpop.permute.xlu0 %286
  %v289 = vsel %vm186, %v287, 0.0
  %v291 = vlaneseq
  %v292 = vshrl.u32 %v291, 7
  %v293 = vsub.s32 0, %v292
  %v294 = vrot.slane %v185, %v293
  %vm296 = vcmask 523264
  %v298 = vsel %vm296, %v289, 0
  %300 = vmatprep.subr.mxu0 0.0
  %301 = vmatpush1.msra.mxu0 0.0
  %302 = vmatprep.subr.mxu0 0.0
  %303 = vmatpush1.msra.mxu0 0.0
  %304 = vmatprep.subr.mxu0 0.0
  %305 = vmatpush1.msra.mxu0 0.0
  %306 = vmatprep.subr.mxu0 0.0
  %307 = vmatpush1.msra.mxu0 0.0
  %308 = vmatprep.subr.mxu0 0.0
  %309 = vmatpush1.msra.mxu0 0.0
  %310 = vmatprep.subr.mxu0 0.0
  %311 = vmatpush1.msra.mxu0 0.0
  %312 = vmatprep.subr.mxu0 0.0
  %313 = vmatpush1.msra.mxu0 0.0
  %314 = vmatprep.subr.mxu0 0.0
  %315 = vmatpush1.msra.mxu0 0.0
  %316 = vmatprep.subr.mxu0 0.0
  %317 = vmatpush1.msra.mxu0 %v184
  %318 = vmatprep.subr.mxu0 0.0
  %319 = vmatpush1.msra.mxu0 %v183
  %320 = vmatprep.subr.mxu0 0.0
  %321 = vmatpush1.msra.mxu0 %v182
  %322 = vmatprep.subr.mxu0 0.0
  %323 = vmatpush1.msra.mxu0 %v181
  %324 = vmatprep.subr.mxu0 0.0
  %325 = vmatpush1.msra.mxu0 %v180
  %326 = vmatprep.subr.mxu0 0.0
  %327 = vmatpush1.msra.mxu0 %v179
  %328 = vmatprep.subr.mxu0 0.0
  %329 = vmatpush1.msra.mxu0 %v178
  %330 = vmatprep.subr.mxu0 0.0
  %331 = vmatpush1.msra.mxu0 %v177
  %332 = vmatprep.subr.mxu0 0.0
  %333 = vmatpush2.msra.mxu0 0.0
  %334 = vmatprep.subr.mxu0 0.0
  %335 = vmatpush2.msra.mxu0 0.0
  %336 = vmatprep.subr.mxu0 0.0
  %337 = vmatpush2.msra.mxu0 0.0
  %338 = vmatprep.subr.mxu0 0.0
  %339 = vmatpush2.msra.mxu0 0.0
  %340 = vmatprep.subr.mxu0 0.0
  %341 = vmatpush2.msra.mxu0 0.0
  %342 = vmatprep.subr.mxu0 0.0
  %343 = vmatpush2.msra.mxu0 0.0
  %344 = vmatprep.subr.mxu0 0.0
  %345 = vmatpush2.msra.mxu0 0.0
  %346 = vmatprep.subr.mxu0 0.0
  %347 = vmatpush2.msra.mxu0 0.0
  %348 = vmatprep.subr.mxu0 0.0
  %349 = vmatpush2.msra.mxu0 0.0
  %350 = vmatprep.subr.mxu0 0.0
  %351 = vmatpush2.msra.mxu0 0.0
  %352 = vmatprep.subr.mxu0 0.0
  %353 = vmatpush2.msra.mxu0 0.0
  %354 = vmatprep.subr.mxu0 0.0
  %355 = vmatpush2.msra.mxu0 0.0
  %356 = vmatprep.subr.mxu0 0.0
  %357 = vmatpush2.msra.mxu0 0.0
  %358 = vmatprep.subr.mxu0 0.0
  %359 = vmatpush2.msra.mxu0 0.0
  %360 = vmatprep.subr.mxu0 0.0
  %361 = vmatpush2.msra.mxu0 0.0
  %362 = vmatprep.subr.mxu0 0.0
  %363 = vmatpush2.msra.mxu0 0.0
  %364 = vmatprep.mubr.f32.mxu0 0.0
  %365 = vmatmul.mubr.f32.gmra.mxu0 %v298
  %v366 = vpop.f32.mrf.mxu0
  %v367 = vadd.f32 %v294, %v366
  %v368 = vpop.f32.mrf.mxu0
  %369 = vdwg.mxu0
  %v370 = vxor.u32 %v367, 2147483648
  %v371 = vmul.f32 %v370, 1.442695
  %v372 = vpow.pop %v371
  %v373 = vadd.f32 %v372, 1.0
  %v374 = vrcp.pop %v373
  %v375 = vmul.f32 1.0, %v374
  %v376 = vtanh.pop %v367
  %v377 = vmul.f32 %v375, 0.0
  %379 = vrot.lane.b32.xlu0 %v376, 64
  %v380 = vpop.permute.xlu0 %379
  %v382 = vmul.f32 %v375, %v380
  %384 = vrot.lane.b32.xlu0 %v382, 32
  %v385 = vpop.permute.xlu0 %384
  %v387 = vadd.f32 %v377, %v385
  %v388 = vtanh.pop %v387
  %390 = vrot.lane.b32.xlu0 %v388, 64
  %v391 = vpop.permute.xlu0 %390
  %v393 = vmul.f32 %v375, %v391
  %v394 = vsel %vm186, %v287, 0
  %396 = vmatprep.subr.mxu0 0.0
  %397 = vmatpush1.msra.mxu0 0.0
  %398 = vmatprep.subr.mxu0 0.0
  %399 = vmatpush1.msra.mxu0 0.0
  %400 = vmatprep.subr.mxu0 0.0
  %401 = vmatpush1.msra.mxu0 0.0
  %402 = vmatprep.subr.mxu0 0.0
  %403 = vmatpush1.msra.mxu0 0.0
  %404 = vmatprep.subr.mxu0 0.0
  %405 = vmatpush1.msra.mxu0 0.0
  %406 = vmatprep.subr.mxu0 0.0
  %407 = vmatpush1.msra.mxu0 0.0
  %408 = vmatprep.subr.mxu0 0.0
  %409 = vmatpush1.msra.mxu0 0.0
  %410 = vmatprep.subr.mxu0 0.0
  %411 = vmatpush1.msra.mxu0 0.0
  %412 = vmatprep.subr.mxu0 0.0
  %413 = vmatpush1.msra.mxu0 0.0
  %414 = vmatprep.subr.mxu0 0.0
  %415 = vmatpush1.msra.mxu0 0.0
  %416 = vmatprep.subr.mxu0 0.0
  %417 = vmatpush1.msra.mxu0 0.0
  %418 = vmatprep.subr.mxu0 0.0
  %419 = vmatpush1.msra.mxu0 0.0
  %420 = vmatprep.subr.mxu0 0.0
  %421 = vmatpush1.msra.mxu0 %v176
  %422 = vmatprep.subr.mxu0 0.0
  %423 = vmatpush1.msra.mxu0 %v175
  %424 = vmatprep.subr.mxu0 0.0
  %425 = vmatpush1.msra.mxu0 %v174
  %426 = vmatprep.subr.mxu0 0.0
  %427 = vmatpush1.msra.mxu0 %v173
  %428 = vmatprep.subr.mxu0 0.0
  %429 = vmatpush2.msra.mxu0 0.0
  %430 = vmatprep.subr.mxu0 0.0
  %431 = vmatpush2.msra.mxu0 0.0
  %432 = vmatprep.subr.mxu0 0.0
  %433 = vmatpush2.msra.mxu0 0.0
  %434 = vmatprep.subr.mxu0 0.0
  %435 = vmatpush2.msra.mxu0 0.0
  %436 = vmatprep.subr.mxu0 0.0
  %437 = vmatpush2.msra.mxu0 0.0
  %438 = vmatprep.subr.mxu0 0.0
  %439 = vmatpush2.msra.mxu0 0.0
  %440 = vmatprep.subr.mxu0 0.0
  %441 = vmatpush2.msra.mxu0 0.0
  %442 = vmatprep.subr.mxu0 0.0
  %443 = vmatpush2.msra.mxu0 0.0
  %444 = vmatprep.subr.mxu0 0.0
  %445 = vmatpush2.msra.mxu0 0.0
  %446 = vmatprep.subr.mxu0 0.0
  %447 = vmatpush2.msra.mxu0 0.0
  %448 = vmatprep.subr.mxu0 0.0
  %449 = vmatpush2.msra.mxu0 0.0
  %450 = vmatprep.subr.mxu0 0.0
  %451 = vmatpush2.msra.mxu0 0.0
  %452 = vmatprep.subr.mxu0 0.0
  %453 = vmatpush2.msra.mxu0 0.0
  %454 = vmatprep.subr.mxu0 0.0
  %455 = vmatpush2.msra.mxu0 0.0
  %456 = vmatprep.subr.mxu0 0.0
  %457 = vmatpush2.msra.mxu0 0.0
  %458 = vmatprep.subr.mxu0 0.0
  %459 = vmatpush2.msra.mxu0 0.0
  %460 = vmatprep.mubr.f32.mxu0 0.0
  %461 = vmatmul.mubr.f32.gmra.mxu0 %v394
  %v462 = vpop.f32.mrf.mxu0
  %v463 = vadd.f32 0.0, %v462
  %v464 = vpop.f32.mrf.mxu0
  %465 = vdwg.mxu0
  %v466 = vadd.f32 %v140, %v463
  %v467 = vxor.u32 %v466, 2147483648
  %v468 = vmul.f32 %v467, 1.442695
  %v469 = vpow.pop %v468
  %v470 = vadd.f32 %v469, 1.0
  %v471 = vrcp.pop %v470
  %v472 = vmul.f32 1.0, %v471
  %v473 = vtanh.pop %v466
  %v474 = vmul.f32 %v472, %v278
  %476 = vrot.lane.b32.xlu0 %v473, 64
  %v477 = vpop.permute.xlu0 %476
  %v479 = vmul.f32 %v472, %v477
  %481 = vrot.lane.b32.xlu0 %v479, 32
  %v482 = vpop.permute.xlu0 %481
  %v484 = vadd.f32 %v474, %v482
  %v485 = vtanh.pop %v484
  %487 = vrot.lane.b32.xlu0 %v485, 64
  %v488 = vpop.permute.xlu0 %487
  %v490 = vmul.f32 %v472, %v488
  %492 = vrot.lane.b32.xlu0 %v490, 32
  %v493 = vpop.permute.xlu0 %492
  %496 = vrot.lane.b32.xlu0 %v393, 64
  %v497 = vpop.permute.xlu0 %496
  %v499 = vsel %vm186, %v493, %v497
  %v501 = vsel %vm296, %v499, 0
  %503 = vmatprep.subr.mxu0 0.0
  %504 = vmatpush1.msra.mxu0 0.0
  %505 = vmatprep.subr.mxu0 0.0
  %506 = vmatpush1.msra.mxu0 0.0
  %507 = vmatprep.subr.mxu0 0.0
  %508 = vmatpush1.msra.mxu0 0.0
  %509 = vmatprep.subr.mxu0 0.0
  %510 = vmatpush1.msra.mxu0 0.0
  %511 = vmatprep.subr.mxu0 0.0
  %512 = vmatpush1.msra.mxu0 0.0
  %513 = vmatprep.subr.mxu0 0.0
  %514 = vmatpush1.msra.mxu0 0.0
  %515 = vmatprep.subr.mxu0 0.0
  %516 = vmatpush1.msra.mxu0 0.0
  %517 = vmatprep.subr.mxu0 0.0
  %518 = vmatpush1.msra.mxu0 0.0
  %519 = vmatprep.subr.mxu0 0.0
  %520 = vmatpush1.msra.mxu0 %v184
  %521 = vmatprep.subr.mxu0 0.0
  %522 = vmatpush1.msra.mxu0 %v183
  %523 = vmatprep.subr.mxu0 0.0
  %524 = vmatpush1.msra.mxu0 %v182
  %525 = vmatprep.subr.mxu0 0.0
  %526 = vmatpush1.msra.mxu0 %v181
  %527 = vmatprep.subr.mxu0 0.0
  %528 = vmatpush1.msra.mxu0 %v180
  %529 = vmatprep.subr.mxu0 0.0
  %530 = vmatpush1.msra.mxu0 %v179
  %531 = vmatprep.subr.mxu0 0.0
  %532 = vmatpush1.msra.mxu0 %v178
  %533 = vmatprep.subr.mxu0 0.0
  %534 = vmatpush1.msra.mxu0 %v177
  %535 = vmatprep.subr.mxu0 0.0
  %536 = vmatpush2.msra.mxu0 0.0
  %537 = vmatprep.subr.mxu0 0.0
  %538 = vmatpush2.msra.mxu0 0.0
  %539 = vmatprep.subr.mxu0 0.0
  %540 = vmatpush2.msra.mxu0 0.0
  %541 = vmatprep.subr.mxu0 0.0
  %542 = vmatpush2.msra.mxu0 0.0
  %543 = vmatprep.subr.mxu0 0.0
  %544 = vmatpush2.msra.mxu0 0.0
  %545 = vmatprep.subr.mxu0 0.0
  %546 = vmatpush2.msra.mxu0 0.0
  %547 = vmatprep.subr.mxu0 0.0
  %548 = vmatpush2.msra.mxu0 0.0
  %549 = vmatprep.subr.mxu0 0.0
  %550 = vmatpush2.msra.mxu0 0.0
  %551 = vmatprep.subr.mxu0 0.0
  %552 = vmatpush2.msra.mxu0 0.0
  %553 = vmatprep.subr.mxu0 0.0
  %554 = vmatpush2.msra.mxu0 0.0
  %555 = vmatprep.subr.mxu0 0.0
  %556 = vmatpush2.msra.mxu0 0.0
  %557 = vmatprep.subr.mxu0 0.0
  %558 = vmatpush2.msra.mxu0 0.0
  %559 = vmatprep.subr.mxu0 0.0
  %560 = vmatpush2.msra.mxu0 0.0
  %561 = vmatprep.subr.mxu0 0.0
  %562 = vmatpush2.msra.mxu0 0.0
  %563 = vmatprep.subr.mxu0 0.0
  %564 = vmatpush2.msra.mxu0 0.0
  %565 = vmatprep.subr.mxu0 0.0
  %566 = vmatpush2.msra.mxu0 0.0
  %567 = vmatprep.mubr.f32.mxu0 0.0
  %568 = vmatmul.mubr.f32.gmra.mxu0 %v501
  %v569 = vpop.f32.mrf.mxu0
  %v570 = vadd.f32 %v294, %v569
  %v571 = vpop.f32.mrf.mxu0
  %572 = vdwg.mxu0
  %v573 = vxor.u32 %v570, 2147483648
  %v574 = vmul.f32 %v573, 1.442695
  %v575 = vpow.pop %v574
  %v576 = vadd.f32 %v575, 1.0
  %v577 = vrcp.pop %v576
  %v578 = vmul.f32 1.0, %v577
  %v579 = vtanh.pop %v570
  %v580 = vmul.f32 %v578, %v387
  %582 = vrot.lane.b32.xlu0 %v579, 64
  %v583 = vpop.permute.xlu0 %582
  %v585 = vmul.f32 %v578, %v583
  %587 = vrot.lane.b32.xlu0 %v585, 32
  %v588 = vpop.permute.xlu0 %587
  %v590 = vadd.f32 %v580, %v588
  %v591 = vtanh.pop %v590
  %593 = vrot.lane.b32.xlu0 %v591, 64
  %v594 = vpop.permute.xlu0 %593
  %v596 = vmul.f32 %v578, %v594
  %v597 = vsel %vm186, %v493, 0
  %599 = vmatprep.subr.mxu0 0.0
  %600 = vmatpush1.msra.mxu0 0.0
  %601 = vmatprep.subr.mxu0 0.0
  %602 = vmatpush1.msra.mxu0 0.0
  %603 = vmatprep.subr.mxu0 0.0
  %604 = vmatpush1.msra.mxu0 0.0
  %605 = vmatprep.subr.mxu0 0.0
  %606 = vmatpush1.msra.mxu0 0.0
  %607 = vmatprep.subr.mxu0 0.0
  %608 = vmatpush1.msra.mxu0 0.0
  %609 = vmatprep.subr.mxu0 0.0
  %610 = vmatpush1.msra.mxu0 0.0
  %611 = vmatprep.subr.mxu0 0.0
  %612 = vmatpush1.msra.mxu0 0.0
  %613 = vmatprep.subr.mxu0 0.0
  %614 = vmatpush1.msra.mxu0 0.0
  %615 = vmatprep.subr.mxu0 0.0
  %616 = vmatpush1.msra.mxu0 0.0
  %617 = vmatprep.subr.mxu0 0.0
  %618 = vmatpush1.msra.mxu0 0.0
  %619 = vmatprep.subr.mxu0 0.0
  %620 = vmatpush1.msra.mxu0 0.0
  %621 = vmatprep.subr.mxu0 0.0
  %622 = vmatpush1.msra.mxu0 0.0
  %623 = vmatprep.subr.mxu0 0.0
  %624 = vmatpush1.msra.mxu0 %v176
  %625 = vmatprep.subr.mxu0 0.0
  %626 = vmatpush1.msra.mxu0 %v175
  %627 = vmatprep.subr.mxu0 0.0
  %628 = vmatpush1.msra.mxu0 %v174
  %629 = vmatprep.subr.mxu0 0.0
  %630 = vmatpush1.msra.mxu0 %v173
  %631 = vmatprep.subr.mxu0 0.0
  %632 = vmatpush2.msra.mxu0 0.0
  %633 = vmatprep.subr.mxu0 0.0
  %634 = vmatpush2.msra.mxu0 0.0
  %635 = vmatprep.subr.mxu0 0.0
  %636 = vmatpush2.msra.mxu0 0.0
  %637 = vmatprep.subr.mxu0 0.0
  %638 = vmatpush2.msra.mxu0 0.0
  %639 = vmatprep.subr.mxu0 0.0
  %640 = vmatpush2.msra.mxu0 0.0
  %641 = vmatprep.subr.mxu0 0.0
  %642 = vmatpush2.msra.mxu0 0.0
  %643 = vmatprep.subr.mxu0 0.0
  %644 = vmatpush2.msra.mxu0 0.0
  %645 = vmatprep.subr.mxu0 0.0
  %646 = vmatpush2.msra.mxu0 0.0
  %647 = vmatprep.subr.mxu0 0.0
  %648 = vmatpush2.msra.mxu0 0.0
  %649 = vmatprep.subr.mxu0 0.0
  %650 = vmatpush2.msra.mxu0 0.0
  %651 = vmatprep.subr.mxu0 0.0
  %652 = vmatpush2.msra.mxu0 0.0
  %653 = vmatprep.subr.mxu0 0.0
  %654 = vmatpush2.msra.mxu0 0.0
  %655 = vmatprep.subr.mxu0 0.0
  %656 = vmatpush2.msra.mxu0 0.0
  %657 = vmatprep.subr.mxu0 0.0
  %658 = vmatpush2.msra.mxu0 0.0
  %659 = vmatprep.subr.mxu0 0.0
  %660 = vmatpush2.msra.mxu0 0.0
  %661 = vmatprep.subr.mxu0 0.0
  %662 = vmatpush2.msra.mxu0 0.0
  %663 = vmatprep.mubr.f32.mxu0 0.0
  %664 = vmatmul.mubr.f32.gmra.mxu0 %v597
  %v665 = vpop.f32.mrf.mxu0
  %v666 = vadd.f32 0.0, %v665
  %v667 = vpop.f32.mrf.mxu0
  %668 = vdwg.mxu0
  %v669 = vadd.f32 %v145, %v666
  %v670 = vxor.u32 %v669, 2147483648
  %v671 = vmul.f32 %v670, 1.442695
  %v672 = vpow.pop %v671
  %v673 = vadd.f32 %v672, 1.0
  %v674 = vrcp.pop %v673
  %v675 = vmul.f32 1.0, %v674
  %v676 = vtanh.pop %v669
  %v677 = vmul.f32 %v675, %v484
  %679 = vrot.lane.b32.xlu0 %v676, 64
  %v680 = vpop.permute.xlu0 %679
  %v682 = vmul.f32 %v675, %v680
  %684 = vrot.lane.b32.xlu0 %v682, 32
  %v685 = vpop.permute.xlu0 %684
  %v687 = vadd.f32 %v677, %v685
  %v688 = vtanh.pop %v687
  %690 = vrot.lane.b32.xlu0 %v688, 64
  %v691 = vpop.permute.xlu0 %690
  %v693 = vmul.f32 %v675, %v691
  %695 = vrot.lane.b32.xlu0 %v693, 32
  %v696 = vpop.permute.xlu0 %695
  %699 = vrot.lane.b32.xlu0 %v596, 64
  %v700 = vpop.permute.xlu0 %699
  %v702 = vsel %vm186, %v696, %v700
  %v704 = vsel %vm296, %v702, 0
  %706 = vmatprep.subr.mxu0 0.0
  %707 = vmatpush1.msra.mxu0 0.0
  %708 = vmatprep.subr.mxu0 0.0
  %709 = vmatpush1.msra.mxu0 0.0
  %710 = vmatprep.subr.mxu0 0.0
  %711 = vmatpush1.msra.mxu0 0.0
  %712 = vmatprep.subr.mxu0 0.0
  %713 = vmatpush1.msra.mxu0 0.0
  %714 = vmatprep.subr.mxu0 0.0
  %715 = vmatpush1.msra.mxu0 0.0
  %716 = vmatprep.subr.mxu0 0.0
  %717 = vmatpush1.msra.mxu0 0.0
  %718 = vmatprep.subr.mxu0 0.0
  %719 = vmatpush1.msra.mxu0 0.0
  %720 = vmatprep.subr.mxu0 0.0
  %721 = vmatpush1.msra.mxu0 0.0
  %722 = vmatprep.subr.mxu0 0.0
  %723 = vmatpush1.msra.mxu0 %v184
  %724 = vmatprep.subr.mxu0 0.0
  %725 = vmatpush1.msra.mxu0 %v183
  %726 = vmatprep.subr.mxu0 0.0
  %727 = vmatpush1.msra.mxu0 %v182
  %728 = vmatprep.subr.mxu0 0.0
  %729 = vmatpush1.msra.mxu0 %v181
  %730 = vmatprep.subr.mxu0 0.0
  %731 = vmatpush1.msra.mxu0 %v180
  %732 = vmatprep.subr.mxu0 0.0
  %733 = vmatpush1.msra.mxu0 %v179
  %734 = vmatprep.subr.mxu0 0.0
  %735 = vmatpush1.msra.mxu0 %v178
  %736 = vmatprep.subr.mxu0 0.0
  %737 = vmatpush1.msra.mxu0 %v177
  %738 = vmatprep.subr.mxu0 0.0
  %739 = vmatpush2.msra.mxu0 0.0
  %740 = vmatprep.subr.mxu0 0.0
  %741 = vmatpush2.msra.mxu0 0.0
  %742 = vmatprep.subr.mxu0 0.0
  %743 = vmatpush2.msra.mxu0 0.0
  %744 = vmatprep.subr.mxu0 0.0
  %745 = vmatpush2.msra.mxu0 0.0
  %746 = vmatprep.subr.mxu0 0.0
  %747 = vmatpush2.msra.mxu0 0.0
  %748 = vmatprep.subr.mxu0 0.0
  %749 = vmatpush2.msra.mxu0 0.0
  %750 = vmatprep.subr.mxu0 0.0
  %751 = vmatpush2.msra.mxu0 0.0
  %752 = vmatprep.subr.mxu0 0.0
  %753 = vmatpush2.msra.mxu0 0.0
  %754 = vmatprep.subr.mxu0 0.0
  %755 = vmatpush2.msra.mxu0 0.0
  %756 = vmatprep.subr.mxu0 0.0
  %757 = vmatpush2.msra.mxu0 0.0
  %758 = vmatprep.subr.mxu0 0.0
  %759 = vmatpush2.msra.mxu0 0.0
  %760 = vmatprep.subr.mxu0 0.0
  %761 = vmatpush2.msra.mxu0 0.0
  %762 = vmatprep.subr.mxu0 0.0
  %763 = vmatpush2.msra.mxu0 0.0
  %764 = vmatprep.subr.mxu0 0.0
  %765 = vmatpush2.msra.mxu0 0.0
  %766 = vmatprep.subr.mxu0 0.0
  %767 = vmatpush2.msra.mxu0 0.0
  %768 = vmatprep.subr.mxu0 0.0
  %769 = vmatpush2.msra.mxu0 0.0
  %770 = vmatprep.mubr.f32.mxu0 0.0
  %771 = vmatmul.mubr.f32.gmra.mxu0 %v704
  %v772 = vpop.f32.mrf.mxu0
  %v773 = vadd.f32 %v294, %v772
  %v774 = vpop.f32.mrf.mxu0
  %775 = vdwg.mxu0
  %v776 = vxor.u32 %v773, 2147483648
  %v777 = vmul.f32 %v776, 1.442695
  %v778 = vpow.pop %v777
  %v779 = vadd.f32 %v778, 1.0
  %v780 = vrcp.pop %v779
  %v781 = vmul.f32 1.0, %v780
  %v782 = vtanh.pop %v773
  %v783 = vmul.f32 %v781, %v590
  %785 = vrot.lane.b32.xlu0 %v782, 64
  %v786 = vpop.permute.xlu0 %785
  %v788 = vmul.f32 %v781, %v786
  %790 = vrot.lane.b32.xlu0 %v788, 32
  %v791 = vpop.permute.xlu0 %790
  %v793 = vadd.f32 %v783, %v791
  %v794 = vtanh.pop %v793
  %796 = vrot.lane.b32.xlu0 %v794, 64
  %v797 = vpop.permute.xlu0 %796
  %v799 = vmul.f32 %v781, %v797
  %v800 = vsel %vm186, %v696, 0
  %802 = vmatprep.subr.mxu0 0.0
  %803 = vmatpush1.msra.mxu0 0.0
  %804 = vmatprep.subr.mxu0 0.0
  %805 = vmatpush1.msra.mxu0 0.0
  %806 = vmatprep.subr.mxu0 0.0
  %807 = vmatpush1.msra.mxu0 0.0
  %808 = vmatprep.subr.mxu0 0.0
  %809 = vmatpush1.msra.mxu0 0.0
  %810 = vmatprep.subr.mxu0 0.0
  %811 = vmatpush1.msra.mxu0 0.0
  %812 = vmatprep.subr.mxu0 0.0
  %813 = vmatpush1.msra.mxu0 0.0
  %814 = vmatprep.subr.mxu0 0.0
  %815 = vmatpush1.msra.mxu0 0.0
  %816 = vmatprep.subr.mxu0 0.0
  %817 = vmatpush1.msra.mxu0 0.0
  %818 = vmatprep.subr.mxu0 0.0
  %819 = vmatpush1.msra.mxu0 0.0
  %820 = vmatprep.subr.mxu0 0.0
  %821 = vmatpush1.msra.mxu0 0.0
  %822 = vmatprep.subr.mxu0 0.0
  %823 = vmatpush1.msra.mxu0 0.0
  %824 = vmatprep.subr.mxu0 0.0
  %825 = vmatpush1.msra.mxu0 0.0
  %826 = vmatprep.subr.mxu0 0.0
  %827 = vmatpush1.msra.mxu0 %v176
  %828 = vmatprep.subr.mxu0 0.0
  %829 = vmatpush1.msra.mxu0 %v175
  %830 = vmatprep.subr.mxu0 0.0
  %831 = vmatpush1.msra.mxu0 %v174
  %832 = vmatprep.subr.mxu0 0.0
  %833 = vmatpush1.msra.mxu0 %v173
  %834 = vmatprep.subr.mxu0 0.0
  %835 = vmatpush2.msra.mxu0 0.0
  %836 = vmatprep.subr.mxu0 0.0
  %837 = vmatpush2.msra.mxu0 0.0
  %838 = vmatprep.subr.mxu0 0.0
  %839 = vmatpush2.msra.mxu0 0.0
  %840 = vmatprep.subr.mxu0 0.0
  %841 = vmatpush2.msra.mxu0 0.0
  %842 = vmatprep.subr.mxu0 0.0
  %843 = vmatpush2.msra.mxu0 0.0
  %844 = vmatprep.subr.mxu0 0.0
  %845 = vmatpush2.msra.mxu0 0.0
  %846 = vmatprep.subr.mxu0 0.0
  %847 = vmatpush2.msra.mxu0 0.0
  %848 = vmatprep.subr.mxu0 0.0
  %849 = vmatpush2.msra.mxu0 0.0
  %850 = vmatprep.subr.mxu0 0.0
  %851 = vmatpush2.msra.mxu0 0.0
  %852 = vmatprep.subr.mxu0 0.0
  %853 = vmatpush2.msra.mxu0 0.0
  %854 = vmatprep.subr.mxu0 0.0
  %855 = vmatpush2.msra.mxu0 0.0
  %856 = vmatprep.subr.mxu0 0.0
  %857 = vmatpush2.msra.mxu0 0.0
  %858 = vmatprep.subr.mxu0 0.0
  %859 = vmatpush2.msra.mxu0 0.0
  %860 = vmatprep.subr.mxu0 0.0
  %861 = vmatpush2.msra.mxu0 0.0
  %862 = vmatprep.subr.mxu0 0.0
  %863 = vmatpush2.msra.mxu0 0.0
  %864 = vmatprep.subr.mxu0 0.0
  %865 = vmatpush2.msra.mxu0 0.0
  %866 = vmatprep.mubr.f32.mxu0 0.0
  %867 = vmatmul.mubr.f32.gmra.mxu0 %v800
  %v868 = vpop.f32.mrf.mxu0
  %v869 = vadd.f32 0.0, %v868
  %v870 = vpop.f32.mrf.mxu0
  %871 = vdwg.mxu0
  %v872 = vadd.f32 %v150, %v869
  %v873 = vxor.u32 %v872, 2147483648
  %v874 = vmul.f32 %v873, 1.442695
  %v875 = vpow.pop %v874
  %v876 = vadd.f32 %v875, 1.0
  %v877 = vrcp.pop %v876
  %v878 = vmul.f32 1.0, %v877
  %v879 = vtanh.pop %v872
  %v880 = vmul.f32 %v878, %v687
  %882 = vrot.lane.b32.xlu0 %v879, 64
  %v883 = vpop.permute.xlu0 %882
  %v885 = vmul.f32 %v878, %v883
  %887 = vrot.lane.b32.xlu0 %v885, 32
  %v888 = vpop.permute.xlu0 %887
  %v890 = vadd.f32 %v880, %v888
  %v891 = vtanh.pop %v890
  %893 = vrot.lane.b32.xlu0 %v891, 64
  %v894 = vpop.permute.xlu0 %893
  %v896 = vmul.f32 %v878, %v894
  %898 = vrot.lane.b32.xlu0 %v896, 32
  %v899 = vpop.permute.xlu0 %898
  %902 = vrot.lane.b32.xlu0 %v799, 64
  %v903 = vpop.permute.xlu0 %902
  %v905 = vsel %vm186, %v899, %v903
  %v907 = vsel %vm296, %v905, 0
  %909 = vmatprep.subr.mxu0 0.0
  %910 = vmatpush1.msra.mxu0 0.0
  %911 = vmatprep.subr.mxu0 0.0
  %912 = vmatpush1.msra.mxu0 0.0
  %913 = vmatprep.subr.mxu0 0.0
  %914 = vmatpush1.msra.mxu0 0.0
  %915 = vmatprep.subr.mxu0 0.0
  %916 = vmatpush1.msra.mxu0 0.0
  %917 = vmatprep.subr.mxu0 0.0
  %918 = vmatpush1.msra.mxu0 0.0
  %919 = vmatprep.subr.mxu0 0.0
  %920 = vmatpush1.msra.mxu0 0.0
  %921 = vmatprep.subr.mxu0 0.0
  %922 = vmatpush1.msra.mxu0 0.0
  %923 = vmatprep.subr.mxu0 0.0
  %924 = vmatpush1.msra.mxu0 0.0
  %925 = vmatprep.subr.mxu0 0.0
  %926 = vmatpush1.msra.mxu0 %v184
  %927 = vmatprep.subr.mxu0 0.0
  %928 = vmatpush1.msra.mxu0 %v183
  %929 = vmatprep.subr.mxu0 0.0
  %930 = vmatpush1.msra.mxu0 %v182
  %931 = vmatprep.subr.mxu0 0.0
  %932 = vmatpush1.msra.mxu0 %v181
  %933 = vmatprep.subr.mxu0 0.0
  %934 = vmatpush1.msra.mxu0 %v180
  %935 = vmatprep.subr.mxu0 0.0
  %936 = vmatpush1.msra.mxu0 %v179
  %937 = vmatprep.subr.mxu0 0.0
  %938 = vmatpush1.msra.mxu0 %v178
  %939 = vmatprep.subr.mxu0 0.0
  %940 = vmatpush1.msra.mxu0 %v177
  %941 = vmatprep.subr.mxu0 0.0
  %942 = vmatpush2.msra.mxu0 0.0
  %943 = vmatprep.subr.mxu0 0.0
  %944 = vmatpush2.msra.mxu0 0.0
  %945 = vmatprep.subr.mxu0 0.0
  %946 = vmatpush2.msra.mxu0 0.0
  %947 = vmatprep.subr.mxu0 0.0
  %948 = vmatpush2.msra.mxu0 0.0
  %949 = vmatprep.subr.mxu0 0.0
  %950 = vmatpush2.msra.mxu0 0.0
  %951 = vmatprep.subr.mxu0 0.0
  %952 = vmatpush2.msra.mxu0 0.0
  %953 = vmatprep.subr.mxu0 0.0
  %954 = vmatpush2.msra.mxu0 0.0
  %955 = vmatprep.subr.mxu0 0.0
  %956 = vmatpush2.msra.mxu0 0.0
  %957 = vmatprep.subr.mxu0 0.0
  %958 = vmatpush2.msra.mxu0 0.0
  %959 = vmatprep.subr.mxu0 0.0
  %960 = vmatpush2.msra.mxu0 0.0
  %961 = vmatprep.subr.mxu0 0.0
  %962 = vmatpush2.msra.mxu0 0.0
  %963 = vmatprep.subr.mxu0 0.0
  %964 = vmatpush2.msra.mxu0 0.0
  %965 = vmatprep.subr.mxu0 0.0
  %966 = vmatpush2.msra.mxu0 0.0
  %967 = vmatprep.subr.mxu0 0.0
  %968 = vmatpush2.msra.mxu0 0.0
  %969 = vmatprep.subr.mxu0 0.0
  %970 = vmatpush2.msra.mxu0 0.0
  %971 = vmatprep.subr.mxu0 0.0
  %972 = vmatpush2.msra.mxu0 0.0
  %973 = vmatprep.mubr.f32.mxu0 0.0
  %974 = vmatmul.mubr.f32.gmra.mxu0 %v907
  %v975 = vpop.f32.mrf.mxu0
  %v976 = vadd.f32 %v294, %v975
  %v977 = vpop.f32.mrf.mxu0
  %978 = vdwg.mxu0
  %v979 = vxor.u32 %v976, 2147483648
  %v980 = vmul.f32 %v979, 1.442695
  %v981 = vpow.pop %v980
  %v982 = vadd.f32 %v981, 1.0
  %v983 = vrcp.pop %v982
  %v984 = vmul.f32 1.0, %v983
  %v985 = vtanh.pop %v976
  %v986 = vmul.f32 %v984, %v793
  %988 = vrot.lane.b32.xlu0 %v985, 64
  %v989 = vpop.permute.xlu0 %988
  %v991 = vmul.f32 %v984, %v989
  %993 = vrot.lane.b32.xlu0 %v991, 32
  %v994 = vpop.permute.xlu0 %993
  %v996 = vadd.f32 %v986, %v994
  %v997 = vtanh.pop %v996
  %999 = vrot.lane.b32.xlu0 %v997, 64
  %v1000 = vpop.permute.xlu0 %999
  %v1002 = vmul.f32 %v984, %v1000
  %v1003 = vsel %vm186, %v899, 0
  %1005 = vmatprep.subr.mxu0 0.0
  %1006 = vmatpush1.msra.mxu0 0.0
  %1007 = vmatprep.subr.mxu0 0.0
  %1008 = vmatpush1.msra.mxu0 0.0
  %1009 = vmatprep.subr.mxu0 0.0
  %1010 = vmatpush1.msra.mxu0 0.0
  %1011 = vmatprep.subr.mxu0 0.0
  %1012 = vmatpush1.msra.mxu0 0.0
  %1013 = vmatprep.subr.mxu0 0.0
  %1014 = vmatpush1.msra.mxu0 0.0
  %1015 = vmatprep.subr.mxu0 0.0
  %1016 = vmatpush1.msra.mxu0 0.0
  %1017 = vmatprep.subr.mxu0 0.0
  %1018 = vmatpush1.msra.mxu0 0.0
  %1019 = vmatprep.subr.mxu0 0.0
  %1020 = vmatpush1.msra.mxu0 0.0
  %1021 = vmatprep.subr.mxu0 0.0
  %1022 = vmatpush1.msra.mxu0 0.0
  %1023 = vmatprep.subr.mxu0 0.0
  %1024 = vmatpush1.msra.mxu0 0.0
  %1025 = vmatprep.subr.mxu0 0.0
  %1026 = vmatpush1.msra.mxu0 0.0
  %1027 = vmatprep.subr.mxu0 0.0
  %1028 = vmatpush1.msra.mxu0 0.0
  %1029 = vmatprep.subr.mxu0 0.0
  %1030 = vmatpush1.msra.mxu0 %v176
  %1031 = vmatprep.subr.mxu0 0.0
  %1032 = vmatpush1.msra.mxu0 %v175
  %1033 = vmatprep.subr.mxu0 0.0
  %1034 = vmatpush1.msra.mxu0 %v174
  %1035 = vmatprep.subr.mxu0 0.0
  %1036 = vmatpush1.msra.mxu0 %v173
  %1037 = vmatprep.subr.mxu0 0.0
  %1038 = vmatpush2.msra.mxu0 0.0
  %1039 = vmatprep.subr.mxu0 0.0
  %1040 = vmatpush2.msra.mxu0 0.0
  %1041 = vmatprep.subr.mxu0 0.0
  %1042 = vmatpush2.msra.mxu0 0.0
  %1043 = vmatprep.subr.mxu0 0.0
  %1044 = vmatpush2.msra.mxu0 0.0
  %1045 = vmatprep.subr.mxu0 0.0
  %1046 = vmatpush2.msra.mxu0 0.0
  %1047 = vmatprep.subr.mxu0 0.0
  %1048 = vmatpush2.msra.mxu0 0.0
  %1049 = vmatprep.subr.mxu0 0.0
  %1050 = vmatpush2.msra.mxu0 0.0
  %1051 = vmatprep.subr.mxu0 0.0
  %1052 = vmatpush2.msra.mxu0 0.0
  %1053 = vmatprep.subr.mxu0 0.0
  %1054 = vmatpush2.msra.mxu0 0.0
  %1055 = vmatprep.subr.mxu0 0.0
  %1056 = vmatpush2.msra.mxu0 0.0
  %1057 = vmatprep.subr.mxu0 0.0
  %1058 = vmatpush2.msra.mxu0 0.0
  %1059 = vmatprep.subr.mxu0 0.0
  %1060 = vmatpush2.msra.mxu0 0.0
  %1061 = vmatprep.subr.mxu0 0.0
  %1062 = vmatpush2.msra.mxu0 0.0
  %1063 = vmatprep.subr.mxu0 0.0
  %1064 = vmatpush2.msra.mxu0 0.0
  %1065 = vmatprep.subr.mxu0 0.0
  %1066 = vmatpush2.msra.mxu0 0.0
  %1067 = vmatprep.subr.mxu0 0.0
  %1068 = vmatpush2.msra.mxu0 0.0
  %1069 = vmatprep.mubr.f32.mxu0 0.0
  %1070 = vmatmul.mubr.f32.gmra.mxu0 %v1003
  %v1071 = vpop.f32.mrf.mxu0
  %v1072 = vadd.f32 0.0, %v1071
  %v1073 = vpop.f32.mrf.mxu0
  %1074 = vdwg.mxu0
  %v1075 = vadd.f32 %v155, %v1072
  %v1076 = vxor.u32 %v1075, 2147483648
  %v1077 = vmul.f32 %v1076, 1.442695
  %v1078 = vpow.pop %v1077
  %v1079 = vadd.f32 %v1078, 1.0
  %v1080 = vrcp.pop %v1079
  %v1081 = vmul.f32 1.0, %v1080
  %v1082 = vtanh.pop %v1075
  %v1083 = vmul.f32 %v1081, %v890
  %1085 = vrot.lane.b32.xlu0 %v1082, 64
  %v1086 = vpop.permute.xlu0 %1085
  %v1088 = vmul.f32 %v1081, %v1086
  %1090 = vrot.lane.b32.xlu0 %v1088, 32
  %v1091 = vpop.permute.xlu0 %1090
  %v1093 = vadd.f32 %v1083, %v1091
  %v1094 = vtanh.pop %v1093
  %1096 = vrot.lane.b32.xlu0 %v1094, 64
  %v1097 = vpop.permute.xlu0 %1096
  %v1099 = vmul.f32 %v1081, %v1097
  %1101 = vrot.lane.b32.xlu0 %v1099, 32
  %v1102 = vpop.permute.xlu0 %1101
  %1105 = vrot.lane.b32.xlu0 %v1002, 64
  %v1106 = vpop.permute.xlu0 %1105
  %v1108 = vsel %vm186, %v1102, %v1106
  %v1110 = vsel %vm296, %v1108, 0
  %1112 = vmatprep.subr.mxu0 0.0
  %1113 = vmatpush1.msra.mxu0 0.0
  %1114 = vmatprep.subr.mxu0 0.0
  %1115 = vmatpush1.msra.mxu0 0.0
  %1116 = vmatprep.subr.mxu0 0.0
  %1117 = vmatpush1.msra.mxu0 0.0
  %1118 = vmatprep.subr.mxu0 0.0
  %1119 = vmatpush1.msra.mxu0 0.0
  %1120 = vmatprep.subr.mxu0 0.0
  %1121 = vmatpush1.msra.mxu0 0.0
  %1122 = vmatprep.subr.mxu0 0.0
  %1123 = vmatpush1.msra.mxu0 0.0
  %1124 = vmatprep.subr.mxu0 0.0
  %1125 = vmatpush1.msra.mxu0 0.0
  %1126 = vmatprep.subr.mxu0 0.0
  %1127 = vmatpush1.msra.mxu0 0.0
  %1128 = vmatprep.subr.mxu0 0.0
  %1129 = vmatpush1.msra.mxu0 %v184
  %1130 = vmatprep.subr.mxu0 0.0
  %1131 = vmatpush1.msra.mxu0 %v183
  %1132 = vmatprep.subr.mxu0 0.0
  %1133 = vmatpush1.msra.mxu0 %v182
  %1134 = vmatprep.subr.mxu0 0.0
  %1135 = vmatpush1.msra.mxu0 %v181
  %1136 = vmatprep.subr.mxu0 0.0
  %1137 = vmatpush1.msra.mxu0 %v180
  %1138 = vmatprep.subr.mxu0 0.0
  %1139 = vmatpush1.msra.mxu0 %v179
  %1140 = vmatprep.subr.mxu0 0.0
  %1141 = vmatpush1.msra.mxu0 %v178
  %1142 = vmatprep.subr.mxu0 0.0
  %1143 = vmatpush1.msra.mxu0 %v177
  %1144 = vmatprep.subr.mxu0 0.0
  %1145 = vmatpush2.msra.mxu0 0.0
  %1146 = vmatprep.subr.mxu0 0.0
  %1147 = vmatpush2.msra.mxu0 0.0
  %1148 = vmatprep.subr.mxu0 0.0
  %1149 = vmatpush2.msra.mxu0 0.0
  %1150 = vmatprep.subr.mxu0 0.0
  %1151 = vmatpush2.msra.mxu0 0.0
  %1152 = vmatprep.subr.mxu0 0.0
  %1153 = vmatpush2.msra.mxu0 0.0
  %1154 = vmatprep.subr.mxu0 0.0
  %1155 = vmatpush2.msra.mxu0 0.0
  %1156 = vmatprep.subr.mxu0 0.0
  %1157 = vmatpush2.msra.mxu0 0.0
  %1158 = vmatprep.subr.mxu0 0.0
  %1159 = vmatpush2.msra.mxu0 0.0
  %1160 = vmatprep.subr.mxu0 0.0
  %1161 = vmatpush2.msra.mxu0 0.0
  %1162 = vmatprep.subr.mxu0 0.0
  %1163 = vmatpush2.msra.mxu0 0.0
  %1164 = vmatprep.subr.mxu0 0.0
  %1165 = vmatpush2.msra.mxu0 0.0
  %1166 = vmatprep.subr.mxu0 0.0
  %1167 = vmatpush2.msra.mxu0 0.0
  %1168 = vmatprep.subr.mxu0 0.0
  %1169 = vmatpush2.msra.mxu0 0.0
  %1170 = vmatprep.subr.mxu0 0.0
  %1171 = vmatpush2.msra.mxu0 0.0
  %1172 = vmatprep.subr.mxu0 0.0
  %1173 = vmatpush2.msra.mxu0 0.0
  %1174 = vmatprep.subr.mxu0 0.0
  %1175 = vmatpush2.msra.mxu0 0.0
  %1176 = vmatprep.mubr.f32.mxu0 0.0
  %1177 = vmatmul.mubr.f32.gmra.mxu0 %v1110
  %v1178 = vpop.f32.mrf.mxu0
  %v1179 = vadd.f32 %v294, %v1178
  %v1180 = vpop.f32.mrf.mxu0
  %1181 = vdwg.mxu0
  %v1182 = vxor.u32 %v1179, 2147483648
  %v1183 = vmul.f32 %v1182, 1.442695
  %v1184 = vpow.pop %v1183
  %v1185 = vadd.f32 %v1184, 1.0
  %v1186 = vrcp.pop %v1185
  %v1187 = vmul.f32 1.0, %v1186
  %v1188 = vtanh.pop %v1179
  %v1189 = vmul.f32 %v1187, %v996
  %1191 = vrot.lane.b32.xlu0 %v1188, 64
  %v1192 = vpop.permute.xlu0 %1191
  %v1194 = vmul.f32 %v1187, %v1192
  %1196 = vrot.lane.b32.xlu0 %v1194, 32
  %v1197 = vpop.permute.xlu0 %1196
  %v1199 = vadd.f32 %v1189, %v1197
  %v1200 = vtanh.pop %v1199
  %1202 = vrot.lane.b32.xlu0 %v1200, 64
  %v1203 = vpop.permute.xlu0 %1202
  %v1205 = vmul.f32 %v1187, %v1203
  %v1206 = vsel %vm186, %v1102, 0
  %1208 = vmatprep.subr.mxu0 0.0
  %1209 = vmatpush1.msra.mxu0 0.0
  %1210 = vmatprep.subr.mxu0 0.0
  %1211 = vmatpush1.msra.mxu0 0.0
  %1212 = vmatprep.subr.mxu0 0.0
  %1213 = vmatpush1.msra.mxu0 0.0
  %1214 = vmatprep.subr.mxu0 0.0
  %1215 = vmatpush1.msra.mxu0 0.0
  %1216 = vmatprep.subr.mxu0 0.0
  %1217 = vmatpush1.msra.mxu0 0.0
  %1218 = vmatprep.subr.mxu0 0.0
  %1219 = vmatpush1.msra.mxu0 0.0
  %1220 = vmatprep.subr.mxu0 0.0
  %1221 = vmatpush1.msra.mxu0 0.0
  %1222 = vmatprep.subr.mxu0 0.0
  %1223 = vmatpush1.msra.mxu0 0.0
  %1224 = vmatprep.subr.mxu0 0.0
  %1225 = vmatpush1.msra.mxu0 0.0
  %1226 = vmatprep.subr.mxu0 0.0
  %1227 = vmatpush1.msra.mxu0 0.0
  %1228 = vmatprep.subr.mxu0 0.0
  %1229 = vmatpush1.msra.mxu0 0.0
  %1230 = vmatprep.subr.mxu0 0.0
  %1231 = vmatpush1.msra.mxu0 0.0
  %1232 = vmatprep.subr.mxu0 0.0
  %1233 = vmatpush1.msra.mxu0 %v176
  %1234 = vmatprep.subr.mxu0 0.0
  %1235 = vmatpush1.msra.mxu0 %v175
  %1236 = vmatprep.subr.mxu0 0.0
  %1237 = vmatpush1.msra.mxu0 %v174
  %1238 = vmatprep.subr.mxu0 0.0
  %1239 = vmatpush1.msra.mxu0 %v173
  %1240 = vmatprep.subr.mxu0 0.0
  %1241 = vmatpush2.msra.mxu0 0.0
  %1242 = vmatprep.subr.mxu0 0.0
  %1243 = vmatpush2.msra.mxu0 0.0
  %1244 = vmatprep.subr.mxu0 0.0
  %1245 = vmatpush2.msra.mxu0 0.0
  %1246 = vmatprep.subr.mxu0 0.0
  %1247 = vmatpush2.msra.mxu0 0.0
  %1248 = vmatprep.subr.mxu0 0.0
  %1249 = vmatpush2.msra.mxu0 0.0
  %1250 = vmatprep.subr.mxu0 0.0
  %1251 = vmatpush2.msra.mxu0 0.0
  %1252 = vmatprep.subr.mxu0 0.0
  %1253 = vmatpush2.msra.mxu0 0.0
  %1254 = vmatprep.subr.mxu0 0.0
  %1255 = vmatpush2.msra.mxu0 0.0
  %1256 = vmatprep.subr.mxu0 0.0
  %1257 = vmatpush2.msra.mxu0 0.0
  %1258 = vmatprep.subr.mxu0 0.0
  %1259 = vmatpush2.msra.mxu0 0.0
  %1260 = vmatprep.subr.mxu0 0.0
  %1261 = vmatpush2.msra.mxu0 0.0
  %1262 = vmatprep.subr.mxu0 0.0
  %1263 = vmatpush2.msra.mxu0 0.0
  %1264 = vmatprep.subr.mxu0 0.0
  %1265 = vmatpush2.msra.mxu0 0.0
  %1266 = vmatprep.subr.mxu0 0.0
  %1267 = vmatpush2.msra.mxu0 0.0
  %1268 = vmatprep.subr.mxu0 0.0
  %1269 = vmatpush2.msra.mxu0 0.0
  %1270 = vmatprep.subr.mxu0 0.0
  %1271 = vmatpush2.msra.mxu0 0.0
  %1272 = vmatprep.mubr.f32.mxu0 0.0
  %1273 = vmatmul.mubr.f32.gmra.mxu0 %v1206
  %v1274 = vpop.f32.mrf.mxu0
  %v1275 = vadd.f32 0.0, %v1274
  %v1276 = vpop.f32.mrf.mxu0
  %1277 = vdwg.mxu0
  %v1278 = vadd.f32 %v160, %v1275
  %v1279 = vxor.u32 %v1278, 2147483648
  %v1280 = vmul.f32 %v1279, 1.442695
  %v1281 = vpow.pop %v1280
  %v1282 = vadd.f32 %v1281, 1.0
  %v1283 = vrcp.pop %v1282
  %v1284 = vmul.f32 1.0, %v1283
  %v1285 = vtanh.pop %v1278
  %v1286 = vmul.f32 %v1284, %v1093
  %1288 = vrot.lane.b32.xlu0 %v1285, 64
  %v1289 = vpop.permute.xlu0 %1288
  %v1291 = vmul.f32 %v1284, %v1289
  %1293 = vrot.lane.b32.xlu0 %v1291, 32
  %v1294 = vpop.permute.xlu0 %1293
  %v1296 = vadd.f32 %v1286, %v1294
  %v1297 = vtanh.pop %v1296
  %1299 = vrot.lane.b32.xlu0 %v1297, 64
  %v1300 = vpop.permute.xlu0 %1299
  %v1302 = vmul.f32 %v1284, %v1300
  %1304 = vrot.lane.b32.xlu0 %v1302, 32
  %v1305 = vpop.permute.xlu0 %1304
  %1308 = vrot.lane.b32.xlu0 %v1205, 64
  %v1309 = vpop.permute.xlu0 %1308
  %v1311 = vsel %vm186, %v1305, %v1309
  %v1313 = vsel %vm296, %v1311, 0
  %1315 = vmatprep.subr.mxu0 0.0
  %1316 = vmatpush1.msra.mxu0 0.0
  %1317 = vmatprep.subr.mxu0 0.0
  %1318 = vmatpush1.msra.mxu0 0.0
  %1319 = vmatprep.subr.mxu0 0.0
  %1320 = vmatpush1.msra.mxu0 0.0
  %1321 = vmatprep.subr.mxu0 0.0
  %1322 = vmatpush1.msra.mxu0 0.0
  %1323 = vmatprep.subr.mxu0 0.0
  %1324 = vmatpush1.msra.mxu0 0.0
  %1325 = vmatprep.subr.mxu0 0.0
  %1326 = vmatpush1.msra.mxu0 0.0
  %1327 = vmatprep.subr.mxu0 0.0
  %1328 = vmatpush1.msra.mxu0 0.0
  %1329 = vmatprep.subr.mxu0 0.0
  %1330 = vmatpush1.msra.mxu0 0.0
  %1331 = vmatprep.subr.mxu0 0.0
  %1332 = vmatpush1.msra.mxu0 %v184
  %1333 = vmatprep.subr.mxu0 0.0
  %1334 = vmatpush1.msra.mxu0 %v183
  %1335 = vmatprep.subr.mxu0 0.0
  %1336 = vmatpush1.msra.mxu0 %v182
  %1337 = vmatprep.subr.mxu0 0.0
  %1338 = vmatpush1.msra.mxu0 %v181
  %1339 = vmatprep.subr.mxu0 0.0
  %1340 = vmatpush1.msra.mxu0 %v180
  %1341 = vmatprep.subr.mxu0 0.0
  %1342 = vmatpush1.msra.mxu0 %v179
  %1343 = vmatprep.subr.mxu0 0.0
  %1344 = vmatpush1.msra.mxu0 %v178
  %1345 = vmatprep.subr.mxu0 0.0
  %1346 = vmatpush1.msra.mxu0 %v177
  %1347 = vmatprep.subr.mxu0 0.0
  %1348 = vmatpush2.msra.mxu0 0.0
  %1349 = vmatprep.subr.mxu0 0.0
  %1350 = vmatpush2.msra.mxu0 0.0
  %1351 = vmatprep.subr.mxu0 0.0
  %1352 = vmatpush2.msra.mxu0 0.0
  %1353 = vmatprep.subr.mxu0 0.0
  %1354 = vmatpush2.msra.mxu0 0.0
  %1355 = vmatprep.subr.mxu0 0.0
  %1356 = vmatpush2.msra.mxu0 0.0
  %1357 = vmatprep.subr.mxu0 0.0
  %1358 = vmatpush2.msra.mxu0 0.0
  %1359 = vmatprep.subr.mxu0 0.0
  %1360 = vmatpush2.msra.mxu0 0.0
  %1361 = vmatprep.subr.mxu0 0.0
  %1362 = vmatpush2.msra.mxu0 0.0
  %1363 = vmatprep.subr.mxu0 0.0
  %1364 = vmatpush2.msra.mxu0 0.0
  %1365 = vmatprep.subr.mxu0 0.0
  %1366 = vmatpush2.msra.mxu0 0.0
  %1367 = vmatprep.subr.mxu0 0.0
  %1368 = vmatpush2.msra.mxu0 0.0
  %1369 = vmatprep.subr.mxu0 0.0
  %1370 = vmatpush2.msra.mxu0 0.0
  %1371 = vmatprep.subr.mxu0 0.0
  %1372 = vmatpush2.msra.mxu0 0.0
  %1373 = vmatprep.subr.mxu0 0.0
  %1374 = vmatpush2.msra.mxu0 0.0
  %1375 = vmatprep.subr.mxu0 0.0
  %1376 = vmatpush2.msra.mxu0 0.0
  %1377 = vmatprep.subr.mxu0 0.0
  %1378 = vmatpush2.msra.mxu0 0.0
  %1379 = vmatprep.mubr.f32.mxu0 0.0
  %1380 = vmatmul.mubr.f32.gmra.mxu0 %v1313
  %v1381 = vpop.f32.mrf.mxu0
  %v1382 = vadd.f32 %v294, %v1381
  %v1383 = vpop.f32.mrf.mxu0
  %1384 = vdwg.mxu0
  %v1385 = vxor.u32 %v1382, 2147483648
  %v1386 = vmul.f32 %v1385, 1.442695
  %v1387 = vpow.pop %v1386
  %v1388 = vadd.f32 %v1387, 1.0
  %v1389 = vrcp.pop %v1388
  %v1390 = vmul.f32 1.0, %v1389
  %v1391 = vtanh.pop %v1382
  %v1392 = vmul.f32 %v1390, %v1199
  %1394 = vrot.lane.b32.xlu0 %v1391, 64
  %v1395 = vpop.permute.xlu0 %1394
  %v1397 = vmul.f32 %v1390, %v1395
  %1399 = vrot.lane.b32.xlu0 %v1397, 32
  %v1400 = vpop.permute.xlu0 %1399
  %v1402 = vadd.f32 %v1392, %v1400
  %v1403 = vtanh.pop %v1402
  %1405 = vrot.lane.b32.xlu0 %v1403, 64
  %v1406 = vpop.permute.xlu0 %1405
  %v1408 = vmul.f32 %v1390, %v1406
  %v1409 = vsel %vm186, %v1305, 0
  %1411 = vmatprep.subr.mxu0 0.0
  %1412 = vmatpush1.msra.mxu0 0.0
  %1413 = vmatprep.subr.mxu0 0.0
  %1414 = vmatpush1.msra.mxu0 0.0
  %1415 = vmatprep.subr.mxu0 0.0
  %1416 = vmatpush1.msra.mxu0 0.0
  %1417 = vmatprep.subr.mxu0 0.0
  %1418 = vmatpush1.msra.mxu0 0.0
  %1419 = vmatprep.subr.mxu0 0.0
  %1420 = vmatpush1.msra.mxu0 0.0
  %1421 = vmatprep.subr.mxu0 0.0
  %1422 = vmatpush1.msra.mxu0 0.0
  %1423 = vmatprep.subr.mxu0 0.0
  %1424 = vmatpush1.msra.mxu0 0.0
  %1425 = vmatprep.subr.mxu0 0.0
  %1426 = vmatpush1.msra.mxu0 0.0
  %1427 = vmatprep.subr.mxu0 0.0
  %1428 = vmatpush1.msra.mxu0 0.0
  %1429 = vmatprep.subr.mxu0 0.0
  %1430 = vmatpush1.msra.mxu0 0.0
  %1431 = vmatprep.subr.mxu0 0.0
  %1432 = vmatpush1.msra.mxu0 0.0
  %1433 = vmatprep.subr.mxu0 0.0
  %1434 = vmatpush1.msra.mxu0 0.0
  %1435 = vmatprep.subr.mxu0 0.0
  %1436 = vmatpush1.msra.mxu0 %v176
  %1437 = vmatprep.subr.mxu0 0.0
  %1438 = vmatpush1.msra.mxu0 %v175
  %1439 = vmatprep.subr.mxu0 0.0
  %1440 = vmatpush1.msra.mxu0 %v174
  %1441 = vmatprep.subr.mxu0 0.0
  %1442 = vmatpush1.msra.mxu0 %v173
  %1443 = vmatprep.subr.mxu0 0.0
  %1444 = vmatpush2.msra.mxu0 0.0
  %1445 = vmatprep.subr.mxu0 0.0
  %1446 = vmatpush2.msra.mxu0 0.0
  %1447 = vmatprep.subr.mxu0 0.0
  %1448 = vmatpush2.msra.mxu0 0.0
  %1449 = vmatprep.subr.mxu0 0.0
  %1450 = vmatpush2.msra.mxu0 0.0
  %1451 = vmatprep.subr.mxu0 0.0
  %1452 = vmatpush2.msra.mxu0 0.0
  %1453 = vmatprep.subr.mxu0 0.0
  %1454 = vmatpush2.msra.mxu0 0.0
  %1455 = vmatprep.subr.mxu0 0.0
  %1456 = vmatpush2.msra.mxu0 0.0
  %1457 = vmatprep.subr.mxu0 0.0
  %1458 = vmatpush2.msra.mxu0 0.0
  %1459 = vmatprep.subr.mxu0 0.0
  %1460 = vmatpush2.msra.mxu0 0.0
  %1461 = vmatprep.subr.mxu0 0.0
  %1462 = vmatpush2.msra.mxu0 0.0
  %1463 = vmatprep.subr.mxu0 0.0
  %1464 = vmatpush2.msra.mxu0 0.0
  %1465 = vmatprep.subr.mxu0 0.0
  %1466 = vmatpush2.msra.mxu0 0.0
  %1467 = vmatprep.subr.mxu0 0.0
  %1468 = vmatpush2.msra.mxu0 0.0
  %1469 = vmatprep.subr.mxu0 0.0
  %1470 = vmatpush2.msra.mxu0 0.0
  %1471 = vmatprep.subr.mxu0 0.0
  %1472 = vmatpush2.msra.mxu0 0.0
  %1473 = vmatprep.subr.mxu0 0.0
  %1474 = vmatpush2.msra.mxu0 0.0
  %1475 = vmatprep.mubr.f32.mxu0 0.0
  %1476 = vmatmul.mubr.f32.gmra.mxu0 %v1409
  %v1477 = vpop.f32.mrf.mxu0
  %v1478 = vadd.f32 0.0, %v1477
  %v1479 = vpop.f32.mrf.mxu0
  %1480 = vdwg.mxu0
  %v1481 = vadd.f32 %v165, %v1478
  %v1482 = vxor.u32 %v1481, 2147483648
  %v1483 = vmul.f32 %v1482, 1.442695
  %v1484 = vpow.pop %v1483
  %v1485 = vadd.f32 %v1484, 1.0
  %v1486 = vrcp.pop %v1485
  %v1487 = vmul.f32 1.0, %v1486
  %v1488 = vtanh.pop %v1481
  %v1489 = vmul.f32 %v1487, %v1296
  %1491 = vrot.lane.b32.xlu0 %v1488, 64
  %v1492 = vpop.permute.xlu0 %1491
  %v1494 = vmul.f32 %v1487, %v1492
  %1496 = vrot.lane.b32.xlu0 %v1494, 32
  %v1497 = vpop.permute.xlu0 %1496
  %v1499 = vadd.f32 %v1489, %v1497
  %v1500 = vtanh.pop %v1499
  %1502 = vrot.lane.b32.xlu0 %v1500, 64
  %v1503 = vpop.permute.xlu0 %1502
  %v1505 = vmul.f32 %v1487, %v1503
  %1507 = vrot.lane.b32.xlu0 %v1505, 32
  %v1508 = vpop.permute.xlu0 %1507
  %1511 = vrot.lane.b32.xlu0 %v1408, 64
  %v1512 = vpop.permute.xlu0 %1511
  %v1514 = vsel %vm186, %v1508, %v1512
  %v1516 = vsel %vm296, %v1514, 0
  %1518 = vmatprep.subr.mxu0 0.0
  %1519 = vmatpush1.msra.mxu0 0.0
  %1520 = vmatprep.subr.mxu0 0.0
  %1521 = vmatpush1.msra.mxu0 0.0
  %1522 = vmatprep.subr.mxu0 0.0
  %1523 = vmatpush1.msra.mxu0 0.0
  %1524 = vmatprep.subr.mxu0 0.0
  %1525 = vmatpush1.msra.mxu0 0.0
  %1526 = vmatprep.subr.mxu0 0.0
  %1527 = vmatpush1.msra.mxu0 0.0
  %1528 = vmatprep.subr.mxu0 0.0
  %1529 = vmatpush1.msra.mxu0 0.0
  %1530 = vmatprep.subr.mxu0 0.0
  %1531 = vmatpush1.msra.mxu0 0.0
  %1532 = vmatprep.subr.mxu0 0.0
  %1533 = vmatpush1.msra.mxu0 0.0
  %1534 = vmatprep.subr.mxu0 0.0
  %1535 = vmatpush1.msra.mxu0 %v184
  %1536 = vmatprep.subr.mxu0 0.0
  %1537 = vmatpush1.msra.mxu0 %v183
  %1538 = vmatprep.subr.mxu0 0.0
  %1539 = vmatpush1.msra.mxu0 %v182
  %1540 = vmatprep.subr.mxu0 0.0
  %1541 = vmatpush1.msra.mxu0 %v181
  %1542 = vmatprep.subr.mxu0 0.0
  %1543 = vmatpush1.msra.mxu0 %v180
  %1544 = vmatprep.subr.mxu0 0.0
  %1545 = vmatpush1.msra.mxu0 %v179
  %1546 = vmatprep.subr.mxu0 0.0
  %1547 = vmatpush1.msra.mxu0 %v178
  %1548 = vmatprep.subr.mxu0 0.0
  %1549 = vmatpush1.msra.mxu0 %v177
  %1550 = vmatprep.subr.mxu0 0.0
  %1551 = vmatpush2.msra.mxu0 0.0
  %1552 = vmatprep.subr.mxu0 0.0
  %1553 = vmatpush2.msra.mxu0 0.0
  %1554 = vmatprep.subr.mxu0 0.0
  %1555 = vmatpush2.msra.mxu0 0.0
  %1556 = vmatprep.subr.mxu0 0.0
  %1557 = vmatpush2.msra.mxu0 0.0
  %1558 = vmatprep.subr.mxu0 0.0
  %1559 = vmatpush2.msra.mxu0 0.0
  %1560 = vmatprep.subr.mxu0 0.0
  %1561 = vmatpush2.msra.mxu0 0.0
  %1562 = vmatprep.subr.mxu0 0.0
  %1563 = vmatpush2.msra.mxu0 0.0
  %1564 = vmatprep.subr.mxu0 0.0
  %1565 = vmatpush2.msra.mxu0 0.0
  %1566 = vmatprep.subr.mxu0 0.0
  %1567 = vmatpush2.msra.mxu0 0.0
  %1568 = vmatprep.subr.mxu0 0.0
  %1569 = vmatpush2.msra.mxu0 0.0
  %1570 = vmatprep.subr.mxu0 0.0
  %1571 = vmatpush2.msra.mxu0 0.0
  %1572 = vmatprep.subr.mxu0 0.0
  %1573 = vmatpush2.msra.mxu0 0.0
  %1574 = vmatprep.subr.mxu0 0.0
  %1575 = vmatpush2.msra.mxu0 0.0
  %1576 = vmatprep.subr.mxu0 0.0
  %1577 = vmatpush2.msra.mxu0 0.0
  %1578 = vmatprep.subr.mxu0 0.0
  %1579 = vmatpush2.msra.mxu0 0.0
  %1580 = vmatprep.subr.mxu0 0.0
  %1581 = vmatpush2.msra.mxu0 0.0
  %1582 = vmatprep.mubr.f32.mxu0 0.0
  %1583 = vmatmul.mubr.f32.gmra.mxu0 %v1516
  %v1584 = vpop.f32.mrf.mxu0
  %v1585 = vadd.f32 %v294, %v1584
  %v1586 = vpop.f32.mrf.mxu0
  %1587 = vdwg.mxu0
  %v1588 = vxor.u32 %v1585, 2147483648
  %v1589 = vmul.f32 %v1588, 1.442695
  %v1590 = vpow.pop %v1589
  %v1591 = vadd.f32 %v1590, 1.0
  %v1592 = vrcp.pop %v1591
  %v1593 = vmul.f32 1.0, %v1592
  %v1594 = vtanh.pop %v1585
  %v1595 = vmul.f32 %v1593, %v1402
  %1597 = vrot.lane.b32.xlu0 %v1594, 64
  %v1598 = vpop.permute.xlu0 %1597
  %v1600 = vmul.f32 %v1593, %v1598
  %1602 = vrot.lane.b32.xlu0 %v1600, 32
  %v1603 = vpop.permute.xlu0 %1602
  %v1605 = vadd.f32 %v1595, %v1603
  %v1606 = vtanh.pop %v1605
  %1608 = vrot.lane.b32.xlu0 %v1606, 64
  %v1609 = vpop.permute.xlu0 %1608
  %v1611 = vmul.f32 %v1593, %v1609
  %v1612 = vsel %vm186, %v1508, 0
  %1614 = vmatprep.subr.mxu0 0.0
  %1615 = vmatpush1.msra.mxu0 0.0
  %1616 = vmatprep.subr.mxu0 0.0
  %1617 = vmatpush1.msra.mxu0 0.0
  %1618 = vmatprep.subr.mxu0 0.0
  %1619 = vmatpush1.msra.mxu0 0.0
  %1620 = vmatprep.subr.mxu0 0.0
  %1621 = vmatpush1.msra.mxu0 0.0
  %1622 = vmatprep.subr.mxu0 0.0
  %1623 = vmatpush1.msra.mxu0 0.0
  %1624 = vmatprep.subr.mxu0 0.0
  %1625 = vmatpush1.msra.mxu0 0.0
  %1626 = vmatprep.subr.mxu0 0.0
  %1627 = vmatpush1.msra.mxu0 0.0
  %1628 = vmatprep.subr.mxu0 0.0
  %1629 = vmatpush1.msra.mxu0 0.0
  %1630 = vmatprep.subr.mxu0 0.0
  %1631 = vmatpush1.msra.mxu0 0.0
  %1632 = vmatprep.subr.mxu0 0.0
  %1633 = vmatpush1.msra.mxu0 0.0
  %1634 = vmatprep.subr.mxu0 0.0
  %1635 = vmatpush1.msra.mxu0 0.0
  %1636 = vmatprep.subr.mxu0 0.0
  %1637 = vmatpush1.msra.mxu0 0.0
  %1638 = vmatprep.subr.mxu0 0.0
  %1639 = vmatpush1.msra.mxu0 %v176
  %1640 = vmatprep.subr.mxu0 0.0
  %1641 = vmatpush1.msra.mxu0 %v175
  %1642 = vmatprep.subr.mxu0 0.0
  %1643 = vmatpush1.msra.mxu0 %v174
  %1644 = vmatprep.subr.mxu0 0.0
  %1645 = vmatpush1.msra.mxu0 %v173
  %1646 = vmatprep.subr.mxu0 0.0
  %1647 = vmatpush2.msra.mxu0 0.0
  %1648 = vmatprep.subr.mxu0 0.0
  %1649 = vmatpush2.msra.mxu0 0.0
  %1650 = vmatprep.subr.mxu0 0.0
  %1651 = vmatpush2.msra.mxu0 0.0
  %1652 = vmatprep.subr.mxu0 0.0
  %1653 = vmatpush2.msra.mxu0 0.0
  %1654 = vmatprep.subr.mxu0 0.0
  %1655 = vmatpush2.msra.mxu0 0.0
  %1656 = vmatprep.subr.mxu0 0.0
  %1657 = vmatpush2.msra.mxu0 0.0
  %1658 = vmatprep.subr.mxu0 0.0
  %1659 = vmatpush2.msra.mxu0 0.0
  %1660 = vmatprep.subr.mxu0 0.0
  %1661 = vmatpush2.msra.mxu0 0.0
  %1662 = vmatprep.subr.mxu0 0.0
  %1663 = vmatpush2.msra.mxu0 0.0
  %1664 = vmatprep.subr.mxu0 0.0
  %1665 = vmatpush2.msra.mxu0 0.0
  %1666 = vmatprep.subr.mxu0 0.0
  %1667 = vmatpush2.msra.mxu0 0.0
  %1668 = vmatprep.subr.mxu0 0.0
  %1669 = vmatpush2.msra.mxu0 0.0
  %1670 = vmatprep.subr.mxu0 0.0
  %1671 = vmatpush2.msra.mxu0 0.0
  %1672 = vmatprep.subr.mxu0 0.0
  %1673 = vmatpush2.msra.mxu0 0.0
  %1674 = vmatprep.subr.mxu0 0.0
  %1675 = vmatpush2.msra.mxu0 0.0
  %1676 = vmatprep.subr.mxu0 0.0
  %1677 = vmatpush2.msra.mxu0 0.0
  %1678 = vmatprep.mubr.f32.mxu0 0.0
  %1679 = vmatmul.mubr.f32.gmra.mxu0 %v1612
  %v1680 = vpop.f32.mrf.mxu0
  %v1681 = vadd.f32 0.0, %v1680
  %v1682 = vpop.f32.mrf.mxu0
  %1683 = vdwg.mxu0
  %v1684 = vadd.f32 %v170, %v1681
  %v1685 = vxor.u32 %v1684, 2147483648
  %v1686 = vmul.f32 %v1685, 1.442695
  %v1687 = vpow.pop %v1686
  %v1688 = vadd.f32 %v1687, 1.0
  %v1689 = vrcp.pop %v1688
  %v1690 = vmul.f32 1.0, %v1689
  %v1691 = vtanh.pop %v1684
  %v1692 = vmul.f32 %v1690, %v1499
  %1694 = vrot.lane.b32.xlu0 %v1691, 64
  %v1695 = vpop.permute.xlu0 %1694
  %v1697 = vmul.f32 %v1690, %v1695
  %1699 = vrot.lane.b32.xlu0 %v1697, 32
  %v1700 = vpop.permute.xlu0 %1699
  %v1702 = vadd.f32 %v1692, %v1700
  %v1703 = vtanh.pop %v1702
  %1705 = vrot.lane.b32.xlu0 %v1703, 64
  %v1706 = vpop.permute.xlu0 %1705
  %v1708 = vmul.f32 %v1690, %v1706
  %1710 = vrot.lane.b32.xlu0 %v1708, 32
  %v1711 = vpop.permute.xlu0 %1710
  %1714 = vrot.lane.b32.xlu0 %v1611, 64
  %v1715 = vpop.permute.xlu0 %1714
  %v1717 = vsel %vm186, %v1711, %v1715
  %v1719 = vsel %vm296, %v1717, 0
  %1721 = vmatprep.subr.mxu0 0.0
  %1722 = vmatpush1.msra.mxu0 0.0
  %1723 = vmatprep.subr.mxu0 0.0
  %1724 = vmatpush1.msra.mxu0 0.0
  %1725 = vmatprep.subr.mxu0 0.0
  %1726 = vmatpush1.msra.mxu0 0.0
  %1727 = vmatprep.subr.mxu0 0.0
  %1728 = vmatpush1.msra.mxu0 0.0
  %1729 = vmatprep.subr.mxu0 0.0
  %1730 = vmatpush1.msra.mxu0 0.0
  %1731 = vmatprep.subr.mxu0 0.0
  %1732 = vmatpush1.msra.mxu0 0.0
  %1733 = vmatprep.subr.mxu0 0.0
  %1734 = vmatpush1.msra.mxu0 0.0
  %1735 = vmatprep.subr.mxu0 0.0
  %1736 = vmatpush1.msra.mxu0 0.0
  %1737 = vmatprep.subr.mxu0 0.0
  %1738 = vmatpush1.msra.mxu0 %v184
  %1739 = vmatprep.subr.mxu0 0.0
  %1740 = vmatpush1.msra.mxu0 %v183
  %1741 = vmatprep.subr.mxu0 0.0
  %1742 = vmatpush1.msra.mxu0 %v182
  %1743 = vmatprep.subr.mxu0 0.0
  %1744 = vmatpush1.msra.mxu0 %v181
  %1745 = vmatprep.subr.mxu0 0.0
  %1746 = vmatpush1.msra.mxu0 %v180
  %1747 = vmatprep.subr.mxu0 0.0
  %1748 = vmatpush1.msra.mxu0 %v179
  %1749 = vmatprep.subr.mxu0 0.0
  %1750 = vmatpush1.msra.mxu0 %v178
  %1751 = vmatprep.subr.mxu0 0.0
  %1752 = vmatpush1.msra.mxu0 %v177
  %1753 = vmatprep.subr.mxu0 0.0
  %1754 = vmatpush2.msra.mxu0 0.0
  %1755 = vmatprep.subr.mxu0 0.0
  %1756 = vmatpush2.msra.mxu0 0.0
  %1757 = vmatprep.subr.mxu0 0.0
  %1758 = vmatpush2.msra.mxu0 0.0
  %1759 = vmatprep.subr.mxu0 0.0
  %1760 = vmatpush2.msra.mxu0 0.0
  %1761 = vmatprep.subr.mxu0 0.0
  %1762 = vmatpush2.msra.mxu0 0.0
  %1763 = vmatprep.subr.mxu0 0.0
  %1764 = vmatpush2.msra.mxu0 0.0
  %1765 = vmatprep.subr.mxu0 0.0
  %1766 = vmatpush2.msra.mxu0 0.0
  %1767 = vmatprep.subr.mxu0 0.0
  %1768 = vmatpush2.msra.mxu0 0.0
  %1769 = vmatprep.subr.mxu0 0.0
  %1770 = vmatpush2.msra.mxu0 0.0
  %1771 = vmatprep.subr.mxu0 0.0
  %1772 = vmatpush2.msra.mxu0 0.0
  %1773 = vmatprep.subr.mxu0 0.0
  %1774 = vmatpush2.msra.mxu0 0.0
  %1775 = vmatprep.subr.mxu0 0.0
  %1776 = vmatpush2.msra.mxu0 0.0
  %1777 = vmatprep.subr.mxu0 0.0
  %1778 = vmatpush2.msra.mxu0 0.0
  %1779 = vmatprep.subr.mxu0 0.0
  %1780 = vmatpush2.msra.mxu0 0.0
  %1781 = vmatprep.subr.mxu0 0.0
  %1782 = vmatpush2.msra.mxu0 0.0
  %1783 = vmatprep.subr.mxu0 0.0
  %1784 = vmatpush2.msra.mxu0 0.0
  %1785 = vmatprep.mubr.f32.mxu0 0.0
  %1786 = vmatmul.mubr.f32.gmra.mxu0 %v1719
  %v1787 = vpop.f32.mrf.mxu0
  %v1788 = vadd.f32 %v294, %v1787
  %v1789 = vpop.f32.mrf.mxu0
  %1790 = vdwg.mxu0
  %v1791 = vxor.u32 %v1788, 2147483648
  %v1792 = vmul.f32 %v1791, 1.442695
  %v1793 = vpow.pop %v1792
  %v1794 = vadd.f32 %v1793, 1.0
  %v1795 = vrcp.pop %v1794
  %v1796 = vmul.f32 1.0, %v1795
  %v1797 = vtanh.pop %v1788
  %v1798 = vmul.f32 %v1796, %v1605
  %1800 = vrot.lane.b32.xlu0 %v1797, 64
  %v1801 = vpop.permute.xlu0 %1800
  %v1803 = vmul.f32 %v1796, %v1801
  %1805 = vrot.lane.b32.xlu0 %v1803, 32
  %v1806 = vpop.permute.xlu0 %1805
  %v1808 = vadd.f32 %v1798, %v1806
  %v1809 = vtanh.pop %v1808
  %1811 = vrot.lane.b32.xlu0 %v1809, 64
  %v1812 = vpop.permute.xlu0 %1811
  %v1814 = vmul.f32 %v1796, %v1812
  %1816 = vrot.lane.b32.xlu0 %v1814, 32
  %v1817 = vpop.permute.xlu0 %1816
  %1819 = vst.msk [vmem:[%s6] sm:$0xff] %vm186, %v1817
  // Predicated region
  $region26: #{lstm_forward.1} parent=0 // pred_check
    _
  $region27: #{lstm_forward.1} parent=0 // pred_check_branch
    %1821 = sbr.rel (0) target = $region29
  $region28: #{lstm_forward.1} parent=0 // pred_region
    _
  $region29: #{lstm_forward.1} parent=0 // pred_fallthru
    _
  // Predicated region
  $region30: #{lstm_forward.1} parent=0 // pred_check
    _
  $region31: #{lstm_forward.1} parent=0 // pred_check_branch
    %1823 = sbr.rel (0) target = $region33
  $region32: #{lstm_forward.1} parent=0 // pred_region
    _
  $region33: #{lstm_forward.1} parent=0 // pred_fallthru
    _

</llo_original>
